<compile_context>
chip_gen: v6e
topology: v6e:2x2x1
jax: 0.10.0
libtpu: 0.0.40
codegen_flags: <defaults>
</compile_context>

<pallas_src>
import functools

import jax
import jax.numpy as jnp
import numpy as np
from jax import lax
from jax.experimental import pallas as pl
from jax.experimental.pallas import tpu as pltpu

LN_EPS = 1e-5   # torch.nn.LayerNorm default eps
SHIFT = 1e-6    # the "+ 1e-06" in the reference forward


def _vmem():
    return pl.BlockSpec(memory_space=pltpu.MemorySpace.VMEM)


# ---------------------------------------------------------------------------
# in-kernel helpers
# ---------------------------------------------------------------------------
def _ln(s):
    # LayerNorm(elementwise_affine=False): centered two-pass variance in f32,
    # rsqrt goes to the EUP slot.
    m = jnp.mean(s, axis=-1, keepdims=True)
    c = s - m
    v = jnp.mean(c * c, axis=-1, keepdims=True)
    return c * lax.rsqrt(v + LN_EPS)


def _mxu(a, b):
    # f32 x f32 -> f32 (MXU; also supported by interpret mode on CPU).
    return jnp.dot(a, b, preferred_element_type=jnp.float32)


# ---------------------------------------------------------------------------
# the single fused kernel: whole encoder forward
# ---------------------------------------------------------------------------
def _encoder_kernel(fp_ref, adj_dd_ref, adj_dt_ref, adj_td_ref, adj_pp_ref,
                    w_init_ref, fp_w1_ref, fp_w2_ref,
                    xd0_ref, xp0_ref, rel_w1_ref, rel_w2_ref,
                    xfp_ref, x1_ref, x2_ref, *, nd, nt):
    out = x1_ref.shape[1]
    adj_dd = adj_dd_ref[...]                 # [Nd, Nd]
    adj_dt = adj_dt_ref[...]                 # [Nd, Nt]
    adj_td = adj_td_ref[...]                 # [Np, Nd], rows >= nt are zero
    adj_pp = adj_pp_ref[...]                 # [Np, Np]

    # ---- gnn_based_fp: fp_init Linear + 2x graph_node_update ----
    x_fp = _mxu(fp_ref[...], w_init_ref[...])              # [Nd, h]
    xfp_ref[...] = x_fp

    # fp_wK = [blockdiag(W_basis) | loop]  -> one MXU pass per layer
    y = _mxu(x_fp, fp_w1_ref[...])                         # [Nd, 2*out]
    x = _ln(_mxu(adj_dd, y[:, :out]) + y[:, out:] + SHIFT)
    y = _mxu(x, fp_w2_ref[...])
    x1_ref[...] = _ln(_mxu(adj_dd, y[:, :out]) + y[:, out:] + SHIFT)

    # ---- gnn_based_protein: 2x multi_rela_graph_node_update ----
    xd = xd0_ref[...]                                      # [Nd, h]
    xp = xp0_ref[...]                                      # [Np, h]
    for w_ref in (rel_w1_ref, rel_w2_ref):
        # rel_w = [blockdiag(W1)|blockdiag(W3)|loop|blockdiag(W4)|blockdiag(W2)]
        # stacked LHS -> one wide MXU pass for the whole feature stage
        xall = jnp.concatenate([xd, xp], axis=0)           # [Nd+Np, in]
        y = _mxu(xall, w_ref[...])                         # [Nd+Np, 5*out]

        yd_w1 = y[:nd, 0:out]                 # blockmm(xd, W1)
        yd_w3 = y[:nd, out:2 * out]           # blockmm(xd, W3)
        yd_lp = y[:nd, 2 * out:3 * out]       # xd @ loop
        yp_w4 = y[nd:, 3 * out:4 * out]       # blockmm(xp, W4)
        yp_lp = y[nd:, 2 * out:3 * out]       # xp @ loop
        yt_w2 = y[nd:nd + nt, 4 * out:5 * out]  # blockmm(x_target, W2)

        # drug:    LN(adj_dd@bmm(xd,W1) + adj_dt@bmm(xt,W2) + xd@loop + eps)
        xd = _ln(_mxu(adj_dd, yd_w1) + _mxu(adj_dt, yt_w2) + yd_lp + SHIFT)
        # protein: LN(adj_pp@bmm(xp,W4) + pad(adj_dt.T)@bmm(xd_old,W3)
        #             + xp@loop + eps)     -- one LN, one full-tile store
        xp = _ln(_mxu(adj_pp, yp_w4) + _mxu(adj_td, yd_w3) + yp_lp + SHIFT)

    x2_ref[...] = xd


def _encoder_pallas(fp, adj_dd, adj_dt, adj_td, adj_pp,
                    w_init, fp_w1, fp_w2, xd0, xp0, rel_w1, rel_w2,
                    *, target_num):
    nd = fp.shape[0]
    h_dim = w_init.shape[1]
    out_dim = fp_w1.shape[1] // 2
    kern = functools.partial(_encoder_kernel, nd=nd, nt=target_num)
    return pl.pallas_call(
        kern,
        out_shape=(jax.ShapeDtypeStruct((nd, h_dim), jnp.float32),
                   jax.ShapeDtypeStruct((nd, out_dim), jnp.float32),
                   jax.ShapeDtypeStruct((nd, out_dim), jnp.float32)),
        in_specs=[_vmem()] * 12,
        out_specs=(_vmem(), _vmem(), _vmem()),
        compiler_params=pltpu.CompilerParams(
            vmem_limit_bytes=32 * 1024 * 1024),
    )(fp, adj_dd, adj_dt, adj_td, adj_pp, w_init, fp_w1, fp_w2,
      xd0, xp0, rel_w1, rel_w2)


# ---------------------------------------------------------------------------
# one-time weight packing (hoisted out of the per-forward path)
# ---------------------------------------------------------------------------
def _block_diag(w):
    """[B, si, so] -> block-diagonal [B*si, B*so] so that
    x @ blockdiag == einsum('abc,bcd->abd', x.view(N,B,si), w).reshape(N,-1)."""
    B, si, so = w.shape
    eye = jnp.eye(B, dtype=w.dtype)
    return jnp.einsum("bio,bc->bico", w, eye).reshape(B * si, B * so)


def pack_encoder_params(params):
    """Pack all weights ONCE (parameters, not activations)."""
    def rel(p):   # [in, 5*out] = [W1 | W3 | loop | W4 | W2]
        return jnp.concatenate(
            [_block_diag(p["w1"]), _block_diag(p["w3"]), p["loop"],
             _block_diag(p["w4"]), _block_diag(p["w2"])], axis=1)

    return {
        "w_init": params["fp_init_w"],
        "fp_w1": jnp.concatenate([_block_diag(params["fp_l1"]["w"]),
                                  params["fp_l1"]["loop"]], axis=1),
        "fp_w2": jnp.concatenate([_block_diag(params["fp_l2"]["w"]),
                                  params["fp_l2"]["loop"]], axis=1),
        "rel_w1": rel(params["p_l1"]),
        "rel_w2": rel(params["p_l2"]),
        "drug_emb": params["drug_emb"],
        "kg_emb": params["kg_emb"],
    }


# ---------------------------------------------------------------------------
# full encoder forward: ONE Pallas launch + two gathers + one pad
# ---------------------------------------------------------------------------
@functools.partial(jax.jit, static_argnames=("target_num",))
def encoder_forward(packed, fp, drug_ids, kg_ids, adjs, target_num):
    adj_dd, adj_dt, adj_pp = adjs
    nd = adj_dd.shape[0]
    np_ = adj_pp.shape[0]
    nt = target_num

    # zero-padded transpose of adj_dt -> [Np, Nd]; rows >= nt are exact zeros,
    # so the in-kernel protein update is a single LN + one full-tile store.
    adj_td = jnp.zeros((np_, nd), adj_dt.dtype).at[:nt, :].set(adj_dt.T)

    # TODO(synk): embedding gathers stay in plain JAX (data-dependent gather);
    # could move in-kernel via PrefetchScalarGridSpec + pl.Element row maps.
    xd0 = jnp.take(packed["drug_emb"], drug_ids, axis=0)   # x_drug_init
    xp0 = jnp.take(packed["kg_emb"], kg_ids, axis=0)
    # NOTE: drug_mark defaults to None in the reference -> no zeroing applied;
    #       nn.Dropout and loop_weight_p are unused in forward.

    x_fp, x1, x2 = _encoder_pallas(
        fp, adj_dd, adj_dt, adj_td, adj_pp,
        packed["w_init"], packed["fp_w1"], packed["fp_w2"],
        xd0, xp0, packed["rel_w1"], packed["rel_w2"],
        target_num=nt)
    return x_fp, xd0, x1, x2


# ---------------------------------------------------------------------------
# plain-JAX reference (mirrors the PyTorch forward 1:1, f32 HIGHEST)
# ---------------------------------------------------------------------------
def reference_forward(params, fp, drug_ids, kg_ids, adjs, target_num):
    HI = jax.lax.Precision.HIGHEST
    mm = lambda a, b: jnp.dot(a, b, precision=HI)

    def bmm(x, w):
        n = x.shape[0]
        B, si, so = w.shape
        return jnp.einsum("nbi,bio->nbo", x.reshape(n, B, si), w,
                          precision=HI).reshape(n, B * so)

    def ln(s):
        m = s.mean(-1, keepdims=True)
        v = ((s - m) ** 2).mean(-1, keepdims=True)
        return (s - m) / jnp.sqrt(v + LN_EPS)

    adj_dd, adj_dt, adj_pp = adjs
    x_fp = mm(fp, params["fp_init_w"])
    x = ln(mm(adj_dd, bmm(x_fp, params["fp_l1"]["w"])) +
           mm(x_fp, params["fp_l1"]["loop"]) + SHIFT)
    x1 = ln(mm(adj_dd, bmm(x, params["fp_l2"]["w"])) +
            mm(x, params["fp_l2"]["loop"]) + SHIFT)

    xd = params["drug_emb"][drug_ids]
    xp = params["kg_emb"][kg_ids]
    x_drug_init = xd
    for name in ("p_l1", "p_l2"):
        p = params[name]
        xt = xp[:target_num]
        d1 = mm(adj_dd, bmm(xd, p["w1"]))
        d2 = mm(adj_dt, bmm(xt, p["w2"]))
        d3 = mm(xd, p["loop"])
        xd_new = ln(d1 + d2 + d3 + SHIFT)
        p1 = mm(adj_pp, bmm(xp, p["w4"]))
        p2 = mm(adj_dt.T, bmm(xd, p["w3"]))
        p3 = mm(xp, p["loop"])
        t = (p1 + p3).at[:target_num].add(p2)
        xp_new = ln(t + SHIFT)
        xd, xp = xd_new, xp_new
    return x_fp, x_drug_init, x1, xd


# ---------------------------------------------------------------------------
# deterministic parameters / inputs
# ---------------------------------------------------------------------------
def _p(key, shape, scale=0.2):
    return (scale * jax.random.normal(key, shape)).astype(jnp.float32)


if __name__ == "__main__":
    # small, TPU-friendly shapes: feature dims = 128 (lane-dense), node counts
    # multiples of 8 (sublane-aligned row slices inside the fused kernel).
    Nd, Np, Nt = 16, 32, 8                # drug nodes, protein nodes, targets
    drug_vocab, prot_vocab = 24, 48       # embedding table sizes
    fp_dim, h_dim, out_dim, num_base = 64, 128, 128, 4
    si_h, so = h_dim // num_base, out_dim // num_base
    si_o = out_dim // num_base

    key = jax.random.PRNGKey(0)
    ks = jax.random.split(key, 24)

    params = {
        "fp_init_w": _p(ks[0], (fp_dim, h_dim)),
        "fp_l1": {"w": _p(ks[1], (num_base, si_h, so)),
                  "loop": _p(ks[2], (h_dim, out_dim))},
        "fp_l2": {"w": _p(ks[3], (num_base, si_o, so)),
                  "loop": _p(ks[4], (out_dim, out_dim))},
        "drug_emb": _p(ks[5], (drug_vocab, h_dim)),
        "kg_emb": _p(ks[6], (prot_vocab, h_dim)),
        "p_l1": {"w1": _p(ks[7], (num_base, si_h, so)),
                 "w2": _p(ks[8], (num_base, si_h, so)),
                 "w3": _p(ks[9], (num_base, si_h, so)),
                 "w4": _p(ks[10], (num_base, si_h, so)),
                 "loop": _p(ks[11], (h_dim, out_dim))},
        "p_l2": {"w1": _p(ks[12], (num_base, si_o, so)),
                 "w2": _p(ks[13], (num_base, si_o, so)),
                 "w3": _p(ks[14], (num_base, si_o, so)),
                 "w4": _p(ks[15], (num_base, si_o, so)),
                 "loop": _p(ks[16], (out_dim, out_dim))},
    }

    fp = _p(ks[17], (Nd, fp_dim), scale=1.0)
    drug_node_id = (jnp.arange(Nd, dtype=jnp.int32) * 3) % drug_vocab
    kg_node_id = (jnp.arange(Np, dtype=jnp.int32) * 2 + 1) % prot_vocab
    adj_dd = (jax.random.uniform(ks[18], (Nd, Nd)) / Nd).astype(jnp.float32)
    adj_dt = (jax.random.uniform(ks[19], (Nd, Nt)) / Nt).astype(jnp.float32)
    adj_pp = (jax.random.uniform(ks[20], (Np, Np)) / Np).astype(jnp.float32)
    adjs = (adj_dd, adj_dt, adj_pp)

    # weight packing hoisted out of the per-forward path: done once here.
    packed = jax.block_until_ready(pack_encoder_params(params))

    outs = encoder_forward(packed, fp, drug_node_id, kg_node_id, adjs, Nt)
    outs = jax.block_until_ready(outs)

    refs = reference_forward(params, fp, drug_node_id, kg_node_id, adjs, Nt)
    names = ("drug_fp", "drug_init", "x1", "x2")
    # All-f32 storage + f32 accumulation; only MXU default-precision operand
    # rounding separates kernel from the HIGHEST-precision reference.
    for name, o, r in zip(names, outs, refs):
        assert o.shape == r.shape, (name, o.shape, r.shape)
        assert bool(jnp.all(jnp.isfinite(o))), name
        np.testing.assert_allclose(np.asarray(o), np.asarray(r),
                                   rtol=2e-2, atol=2e-2, err_msg=name)

    print("KERNEL_OK")
</pallas_src>

<mosaic_0001>
module attributes {stable_mosaic.version = 11 : i64} {
  func.func @_encoder_kernel(%arg0: memref<16x64xf32, #tpu.memory_space<vmem>>, %arg1: memref<16x16xf32, #tpu.memory_space<vmem>>, %arg2: memref<16x8xf32, #tpu.memory_space<vmem>>, %arg3: memref<32x16xf32, #tpu.memory_space<vmem>>, %arg4: memref<32x32xf32, #tpu.memory_space<vmem>>, %arg5: memref<64x128xf32, #tpu.memory_space<vmem>>, %arg6: memref<128x256xf32, #tpu.memory_space<vmem>>, %arg7: memref<128x256xf32, #tpu.memory_space<vmem>>, %arg8: memref<16x128xf32, #tpu.memory_space<vmem>>, %arg9: memref<32x128xf32, #tpu.memory_space<vmem>>, %arg10: memref<128x640xf32, #tpu.memory_space<vmem>>, %arg11: memref<128x640xf32, #tpu.memory_space<vmem>>, %arg12: memref<16x128xf32, #tpu.memory_space<vmem>>, %arg13: memref<16x128xf32, #tpu.memory_space<vmem>>, %arg14: memref<16x128xf32, #tpu.memory_space<vmem>>) attributes {dimension_semantics = [], scalar_prefetch = 0 : i64, scratch_operands = 0 : i64, tpu.core_type = #tpu.core_type<tc>} {
    %c0 = arith.constant 0 : index
    %c0_0 = arith.constant 0 : index
    %0 = vector.load %arg1[%c0, %c0_0] : memref<16x16xf32, #tpu.memory_space<vmem>>, vector<16x16xf32>
    %c0_1 = arith.constant 0 : index
    %c0_2 = arith.constant 0 : index
    %1 = vector.load %arg2[%c0_1, %c0_2] : memref<16x8xf32, #tpu.memory_space<vmem>>, vector<16x8xf32>
    %c0_3 = arith.constant 0 : index
    %c0_4 = arith.constant 0 : index
    %2 = vector.load %arg3[%c0_3, %c0_4] : memref<32x16xf32, #tpu.memory_space<vmem>>, vector<32x16xf32>
    %c0_5 = arith.constant 0 : index
    %c0_6 = arith.constant 0 : index
    %3 = vector.load %arg4[%c0_5, %c0_6] : memref<32x32xf32, #tpu.memory_space<vmem>>, vector<32x32xf32>
    %c0_7 = arith.constant 0 : index
    %c0_8 = arith.constant 0 : index
    %4 = vector.load %arg0[%c0_7, %c0_8] : memref<16x64xf32, #tpu.memory_space<vmem>>, vector<16x64xf32>
    %c0_9 = arith.constant 0 : index
    %c0_10 = arith.constant 0 : index
    %5 = vector.load %arg5[%c0_9, %c0_10] : memref<64x128xf32, #tpu.memory_space<vmem>>, vector<64x128xf32>
    %cst = arith.constant dense<0.000000e+00> : vector<16x128xf32>
    %6 = tpu.matmul %4, %5, %cst {dimension_numbers = #tpu.dot_dimension_numbers<[1], [0], [0], [1], [0, 0, 1, 1], [], []>} : vector<16x64xf32>, vector<64x128xf32>, vector<16x128xf32> -> vector<16x128xf32>
    %c0_11 = arith.constant 0 : index
    %c0_12 = arith.constant 0 : index
    %7 = vector.load %arg12[%c0_11, %c0_12] : memref<16x128xf32, #tpu.memory_space<vmem>>, vector<16x128xf32>
    tpu.vector_store %arg12[%c0_11, %c0_12], %6 {strides = array<i32>} : memref<16x128xf32, #tpu.memory_space<vmem>>, vector<16x128xf32>,
    %c0_13 = arith.constant 0 : index
    %c0_14 = arith.constant 0 : index
    %8 = vector.load %arg6[%c0_13, %c0_14] : memref<128x256xf32, #tpu.memory_space<vmem>>, vector<128x256xf32>
    %cst_15 = arith.constant dense<0.000000e+00> : vector<16x256xf32>
    %9 = tpu.matmul %6, %8, %cst_15 {dimension_numbers = #tpu.dot_dimension_numbers<[1], [0], [0], [1], [0, 0, 1, 1], [], []>} : vector<16x128xf32>, vector<128x256xf32>, vector<16x256xf32> -> vector<16x256xf32>
    %10 = vector.extract_strided_slice %9 {offsets = [0, 0], sizes = [16, 128], strides = [1, 1]} : vector<16x256xf32> to vector<16x128xf32>
    %cst_16 = arith.constant dense<0.000000e+00> : vector<16x128xf32>
    %11 = tpu.matmul %0, %10, %cst_16 {dimension_numbers = #tpu.dot_dimension_numbers<[1], [0], [0], [1], [0, 0, 1, 1], [], []>} : vector<16x16xf32>, vector<16x128xf32>, vector<16x128xf32> -> vector<16x128xf32>
    %12 = vector.extract_strided_slice %9 {offsets = [0, 128], sizes = [16, 128], strides = [1, 1]} : vector<16x256xf32> to vector<16x128xf32>
    %13 = arith.addf %11, %12 : vector<16x128xf32>
    %cst_17 = arith.constant 9.99999997E-7 : f32
    %14 = vector.broadcast %cst_17 : f32 to vector<16x128xf32>
    %15 = arith.addf %13, %14 : vector<16x128xf32>
    %cst_18 = arith.constant dense<0.000000e+00> : vector<16xf32>
    %16 = vector.multi_reduction <add>, %15, %cst_18 [1] : vector<16x128xf32> to vector<16xf32>
    %17 = vector.shape_cast %16 : vector<16xf32> to vector<16x1xf32>
    %cst_19 = arith.constant 1.280000e+02 : f32
    %18 = vector.broadcast %cst_19 : f32 to vector<16x1xf32>
    %19 = arith.divf %17, %18 : vector<16x1xf32>
    %20 = vector.broadcast %19 : vector<16x1xf32> to vector<16x128xf32>
    %21 = arith.subf %15, %20 : vector<16x128xf32>
    %22 = arith.mulf %21, %21 : vector<16x128xf32>
    %cst_20 = arith.constant dense<0.000000e+00> : vector<16xf32>
    %23 = vector.multi_reduction <add>, %22, %cst_20 [1] : vector<16x128xf32> to vector<16xf32>
    %24 = vector.shape_cast %23 : vector<16xf32> to vector<16x1xf32>
    %cst_21 = arith.constant 1.280000e+02 : f32
    %25 = vector.broadcast %cst_21 : f32 to vector<16x1xf32>
    %26 = arith.divf %24, %25 : vector<16x1xf32>
    %cst_22 = arith.constant 9.99999974E-6 : f32
    %27 = vector.broadcast %cst_22 : f32 to vector<16x1xf32>
    %28 = arith.addf %26, %27 : vector<16x1xf32>
    %29 = math.rsqrt %28 : vector<16x1xf32>
    %30 = vector.broadcast %29 : vector<16x1xf32> to vector<16x128xf32>
    %31 = arith.mulf %21, %30 : vector<16x128xf32>
    %c0_23 = arith.constant 0 : index
    %c0_24 = arith.constant 0 : index
    %32 = vector.load %arg7[%c0_23, %c0_24] : memref<128x256xf32, #tpu.memory_space<vmem>>, vector<128x256xf32>
    %cst_25 = arith.constant dense<0.000000e+00> : vector<16x256xf32>
    %33 = tpu.matmul %31, %32, %cst_25 {dimension_numbers = #tpu.dot_dimension_numbers<[1], [0], [0], [1], [0, 0, 1, 1], [], []>} : vector<16x128xf32>, vector<128x256xf32>, vector<16x256xf32> -> vector<16x256xf32>
    %34 = vector.extract_strided_slice %33 {offsets = [0, 0], sizes = [16, 128], strides = [1, 1]} : vector<16x256xf32> to vector<16x128xf32>
    %cst_26 = arith.constant dense<0.000000e+00> : vector<16x128xf32>
    %35 = tpu.matmul %0, %34, %cst_26 {dimension_numbers = #tpu.dot_dimension_numbers<[1], [0], [0], [1], [0, 0, 1, 1], [], []>} : vector<16x16xf32>, vector<16x128xf32>, vector<16x128xf32> -> vector<16x128xf32>
    %36 = vector.extract_strided_slice %33 {offsets = [0, 128], sizes = [16, 128], strides = [1, 1]} : vector<16x256xf32> to vector<16x128xf32>
    %37 = arith.addf %35, %36 : vector<16x128xf32>
    %cst_27 = arith.constant 9.99999997E-7 : f32
    %38 = vector.broadcast %cst_27 : f32 to vector<16x128xf32>
    %39 = arith.addf %37, %38 : vector<16x128xf32>
    %cst_28 = arith.constant dense<0.000000e+00> : vector<16xf32>
    %40 = vector.multi_reduction <add>, %39, %cst_28 [1] : vector<16x128xf32> to vector<16xf32>
    %41 = vector.shape_cast %40 : vector<16xf32> to vector<16x1xf32>
    %cst_29 = arith.constant 1.280000e+02 : f32
    %42 = vector.broadcast %cst_29 : f32 to vector<16x1xf32>
    %43 = arith.divf %41, %42 : vector<16x1xf32>
    %44 = vector.broadcast %43 : vector<16x1xf32> to vector<16x128xf32>
    %45 = arith.subf %39, %44 : vector<16x128xf32>
    %46 = arith.mulf %45, %45 : vector<16x128xf32>
    %cst_30 = arith.constant dense<0.000000e+00> : vector<16xf32>
    %47 = vector.multi_reduction <add>, %46, %cst_30 [1] : vector<16x128xf32> to vector<16xf32>
    %48 = vector.shape_cast %47 : vector<16xf32> to vector<16x1xf32>
    %cst_31 = arith.constant 1.280000e+02 : f32
    %49 = vector.broadcast %cst_31 : f32 to vector<16x1xf32>
    %50 = arith.divf %48, %49 : vector<16x1xf32>
    %cst_32 = arith.constant 9.99999974E-6 : f32
    %51 = vector.broadcast %cst_32 : f32 to vector<16x1xf32>
    %52 = arith.addf %50, %51 : vector<16x1xf32>
    %53 = math.rsqrt %52 : vector<16x1xf32>
    %54 = vector.broadcast %53 : vector<16x1xf32> to vector<16x128xf32>
    %55 = arith.mulf %45, %54 : vector<16x128xf32>
    %c0_33 = arith.constant 0 : index
    %c0_34 = arith.constant 0 : index
    %56 = vector.load %arg13[%c0_33, %c0_34] : memref<16x128xf32, #tpu.memory_space<vmem>>, vector<16x128xf32>
    tpu.vector_store %arg13[%c0_33, %c0_34], %55 {strides = array<i32>} : memref<16x128xf32, #tpu.memory_space<vmem>>, vector<16x128xf32>,
    %c0_35 = arith.constant 0 : index
    %c0_36 = arith.constant 0 : index
    %57 = vector.load %arg8[%c0_35, %c0_36] : memref<16x128xf32, #tpu.memory_space<vmem>>, vector<16x128xf32>
    %c0_37 = arith.constant 0 : index
    %c0_38 = arith.constant 0 : index
    %58 = vector.load %arg9[%c0_37, %c0_38] : memref<32x128xf32, #tpu.memory_space<vmem>>, vector<32x128xf32>
    %59 = tpu.concatenate %57, %58 in 0 : vector<16x128xf32>, vector<32x128xf32> -> vector<48x128xf32>
    %c0_39 = arith.constant 0 : index
    %c0_40 = arith.constant 0 : index
    %60 = vector.load %arg10[%c0_39, %c0_40] : memref<128x640xf32, #tpu.memory_space<vmem>>, vector<128x640xf32>
    %cst_41 = arith.constant dense<0.000000e+00> : vector<48x640xf32>
    %61 = tpu.matmul %59, %60, %cst_41 {dimension_numbers = #tpu.dot_dimension_numbers<[1], [0], [0], [1], [0, 0, 1, 1], [], []>} : vector<48x128xf32>, vector<128x640xf32>, vector<48x640xf32> -> vector<48x640xf32>
    %62 = vector.extract_strided_slice %61 {offsets = [0, 0], sizes = [16, 128], strides = [1, 1]} : vector<48x640xf32> to vector<16x128xf32>
    %63 = vector.extract_strided_slice %61 {offsets = [0, 128], sizes = [16, 128], strides = [1, 1]} : vector<48x640xf32> to vector<16x128xf32>
    %64 = vector.extract_strided_slice %61 {offsets = [0, 256], sizes = [16, 128], strides = [1, 1]} : vector<48x640xf32> to vector<16x128xf32>
    %65 = vector.extract_strided_slice %61 {offsets = [16, 384], sizes = [32, 128], strides = [1, 1]} : vector<48x640xf32> to vector<32x128xf32>
    %66 = vector.extract_strided_slice %61 {offsets = [16, 256], sizes = [32, 128], strides = [1, 1]} : vector<48x640xf32> to vector<32x128xf32>
    %67 = vector.extract_strided_slice %61 {offsets = [16, 512], sizes = [8, 128], strides = [1, 1]} : vector<48x640xf32> to vector<8x128xf32>
    %cst_42 = arith.constant dense<0.000000e+00> : vector<16x128xf32>
    %68 = tpu.matmul %0, %62, %cst_42 {dimension_numbers = #tpu.dot_dimension_numbers<[1], [0], [0], [1], [0, 0, 1, 1], [], []>} : vector<16x16xf32>, vector<16x128xf32>, vector<16x128xf32> -> vector<16x128xf32>
    %cst_43 = arith.constant dense<0.000000e+00> : vector<16x128xf32>
    %69 = tpu.matmul %1, %67, %cst_43 {dimension_numbers = #tpu.dot_dimension_numbers<[1], [0], [0], [1], [0, 0, 1, 1], [], []>} : vector<16x8xf32>, vector<8x128xf32>, vector<16x128xf32> -> vector<16x128xf32>
    %70 = arith.addf %68, %69 : vector<16x128xf32>
    %71 = arith.addf %70, %64 : vector<16x128xf32>
    %cst_44 = arith.constant 9.99999997E-7 : f32
    %72 = vector.broadcast %cst_44 : f32 to vector<16x128xf32>
    %73 = arith.addf %71, %72 : vector<16x128xf32>
    %cst_45 = arith.constant dense<0.000000e+00> : vector<16xf32>
    %74 = vector.multi_reduction <add>, %73, %cst_45 [1] : vector<16x128xf32> to vector<16xf32>
    %75 = vector.shape_cast %74 : vector<16xf32> to vector<16x1xf32>
    %cst_46 = arith.constant 1.280000e+02 : f32
    %76 = vector.broadcast %cst_46 : f32 to vector<16x1xf32>
    %77 = arith.divf %75, %76 : vector<16x1xf32>
    %78 = vector.broadcast %77 : vector<16x1xf32> to vector<16x128xf32>
    %79 = arith.subf %73, %78 : vector<16x128xf32>
    %80 = arith.mulf %79, %79 : vector<16x128xf32>
    %cst_47 = arith.constant dense<0.000000e+00> : vector<16xf32>
    %81 = vector.multi_reduction <add>, %80, %cst_47 [1] : vector<16x128xf32> to vector<16xf32>
    %82 = vector.shape_cast %81 : vector<16xf32> to vector<16x1xf32>
    %cst_48 = arith.constant 1.280000e+02 : f32
    %83 = vector.broadcast %cst_48 : f32 to vector<16x1xf32>
    %84 = arith.divf %82, %83 : vector<16x1xf32>
    %cst_49 = arith.constant 9.99999974E-6 : f32
    %85 = vector.broadcast %cst_49 : f32 to vector<16x1xf32>
    %86 = arith.addf %84, %85 : vector<16x1xf32>
    %87 = math.rsqrt %86 : vector<16x1xf32>
    %88 = vector.broadcast %87 : vector<16x1xf32> to vector<16x128xf32>
    %89 = arith.mulf %79, %88 : vector<16x128xf32>
    %cst_50 = arith.constant dense<0.000000e+00> : vector<32x128xf32>
    %90 = tpu.matmul %3, %65, %cst_50 {dimension_numbers = #tpu.dot_dimension_numbers<[1], [0], [0], [1], [0, 0, 1, 1], [], []>} : vector<32x32xf32>, vector<32x128xf32>, vector<32x128xf32> -> vector<32x128xf32>
    %cst_51 = arith.constant dense<0.000000e+00> : vector<32x128xf32>
    %91 = tpu.matmul %2, %63, %cst_51 {dimension_numbers = #tpu.dot_dimension_numbers<[1], [0], [0], [1], [0, 0, 1, 1], [], []>} : vector<32x16xf32>, vector<16x128xf32>, vector<32x128xf32> -> vector<32x128xf32>
    %92 = arith.addf %90, %91 : vector<32x128xf32>
    %93 = arith.addf %92, %66 : vector<32x128xf32>
    %cst_52 = arith.constant 9.99999997E-7 : f32
    %94 = vector.broadcast %cst_52 : f32 to vector<32x128xf32>
    %95 = arith.addf %93, %94 : vector<32x128xf32>
    %cst_53 = arith.constant dense<0.000000e+00> : vector<32xf32>
    %96 = vector.multi_reduction <add>, %95, %cst_53 [1] : vector<32x128xf32> to vector<32xf32>
    %97 = vector.shape_cast %96 : vector<32xf32> to vector<32x1xf32>
    %cst_54 = arith.constant 1.280000e+02 : f32
    %98 = vector.broadcast %cst_54 : f32 to vector<32x1xf32>
    %99 = arith.divf %97, %98 : vector<32x1xf32>
    %100 = vector.broadcast %99 : vector<32x1xf32> to vector<32x128xf32>
    %101 = arith.subf %95, %100 : vector<32x128xf32>
    %102 = arith.mulf %101, %101 : vector<32x128xf32>
    %cst_55 = arith.constant dense<0.000000e+00> : vector<32xf32>
    %103 = vector.multi_reduction <add>, %102, %cst_55 [1] : vector<32x128xf32> to vector<32xf32>
    %104 = vector.shape_cast %103 : vector<32xf32> to vector<32x1xf32>
    %cst_56 = arith.constant 1.280000e+02 : f32
    %105 = vector.broadcast %cst_56 : f32 to vector<32x1xf32>
    %106 = arith.divf %104, %105 : vector<32x1xf32>
    %cst_57 = arith.constant 9.99999974E-6 : f32
    %107 = vector.broadcast %cst_57 : f32 to vector<32x1xf32>
    %108 = arith.addf %106, %107 : vector<32x1xf32>
    %109 = math.rsqrt %108 : vector<32x1xf32>
    %110 = vector.broadcast %109 : vector<32x1xf32> to vector<32x128xf32>
    %111 = arith.mulf %101, %110 : vector<32x128xf32>
    %112 = tpu.concatenate %89, %111 in 0 : vector<16x128xf32>, vector<32x128xf32> -> vector<48x128xf32>
    %c0_58 = arith.constant 0 : index
    %c0_59 = arith.constant 0 : index
    %113 = vector.load %arg11[%c0_58, %c0_59] : memref<128x640xf32, #tpu.memory_space<vmem>>, vector<128x640xf32>
    %cst_60 = arith.constant dense<0.000000e+00> : vector<48x640xf32>
    %114 = tpu.matmul %112, %113, %cst_60 {dimension_numbers = #tpu.dot_dimension_numbers<[1], [0], [0], [1], [0, 0, 1, 1], [], []>} : vector<48x128xf32>, vector<128x640xf32>, vector<48x640xf32> -> vector<48x640xf32>
    %115 = vector.extract_strided_slice %114 {offsets = [0, 0], sizes = [16, 128], strides = [1, 1]} : vector<48x640xf32> to vector<16x128xf32>
    %116 = vector.extract_strided_slice %114 {offsets = [0, 256], sizes = [16, 128], strides = [1, 1]} : vector<48x640xf32> to vector<16x128xf32>
    %117 = vector.extract_strided_slice %114 {offsets = [16, 512], sizes = [8, 128], strides = [1, 1]} : vector<48x640xf32> to vector<8x128xf32>
    %cst_61 = arith.constant dense<0.000000e+00> : vector<16x128xf32>
    %118 = tpu.matmul %0, %115, %cst_61 {dimension_numbers = #tpu.dot_dimension_numbers<[1], [0], [0], [1], [0, 0, 1, 1], [], []>} : vector<16x16xf32>, vector<16x128xf32>, vector<16x128xf32> -> vector<16x128xf32>
    %cst_62 = arith.constant dense<0.000000e+00> : vector<16x128xf32>
    %119 = tpu.matmul %1, %117, %cst_62 {dimension_numbers = #tpu.dot_dimension_numbers<[1], [0], [0], [1], [0, 0, 1, 1], [], []>} : vector<16x8xf32>, vector<8x128xf32>, vector<16x128xf32> -> vector<16x128xf32>
    %120 = arith.addf %118, %119 : vector<16x128xf32>
    %121 = arith.addf %120, %116 : vector<16x128xf32>
    %cst_63 = arith.constant 9.99999997E-7 : f32
    %122 = vector.broadcast %cst_63 : f32 to vector<16x128xf32>
    %123 = arith.addf %121, %122 : vector<16x128xf32>
    %cst_64 = arith.constant dense<0.000000e+00> : vector<16xf32>
    %124 = vector.multi_reduction <add>, %123, %cst_64 [1] : vector<16x128xf32> to vector<16xf32>
    %125 = vector.shape_cast %124 : vector<16xf32> to vector<16x1xf32>
    %cst_65 = arith.constant 1.280000e+02 : f32
    %126 = vector.broadcast %cst_65 : f32 to vector<16x1xf32>
    %127 = arith.divf %125, %126 : vector<16x1xf32>
    %128 = vector.broadcast %127 : vector<16x1xf32> to vector<16x128xf32>
    %129 = arith.subf %123, %128 : vector<16x128xf32>
    %130 = arith.mulf %129, %129 : vector<16x128xf32>
    %cst_66 = arith.constant dense<0.000000e+00> : vector<16xf32>
    %131 = vector.multi_reduction <add>, %130, %cst_66 [1] : vector<16x128xf32> to vector<16xf32>
    %132 = vector.shape_cast %131 : vector<16xf32> to vector<16x1xf32>
    %cst_67 = arith.constant 1.280000e+02 : f32
    %133 = vector.broadcast %cst_67 : f32 to vector<16x1xf32>
    %134 = arith.divf %132, %133 : vector<16x1xf32>
    %cst_68 = arith.constant 9.99999974E-6 : f32
    %135 = vector.broadcast %cst_68 : f32 to vector<16x1xf32>
    %136 = arith.addf %134, %135 : vector<16x1xf32>
    %137 = math.rsqrt %136 : vector<16x1xf32>
    %138 = vector.broadcast %137 : vector<16x1xf32> to vector<16x128xf32>
    %139 = arith.mulf %129, %138 : vector<16x128xf32>
    %c0_69 = arith.constant 0 : index
    %c0_70 = arith.constant 0 : index
    %140 = vector.load %arg14[%c0_69, %c0_70] : memref<16x128xf32, #tpu.memory_space<vmem>>, vector<16x128xf32>
    tpu.vector_store %arg14[%c0_69, %c0_70], %139 {strides = array<i32>} : memref<16x128xf32, #tpu.memory_space<vmem>>, vector<16x128xf32>,
    return
  }
}

</mosaic_0001>

<llo_original>
// kernel: encoder_forward.1
$region0: #{encoder_forward.1}
  #allocation0 [shape = 'u32[]', space=smem, size = 0x4, offset = 0x4, fixed_abs, tag = 'smem constant byte address 0x4 - core index']
  #allocation1 [shape = 'u32[144,128]{1,0:T(1,128)}', space=vmem, size = 0x12000, scoped, tag = 'internal scratch']
  %s0 = inlined_call_operand.vmem [shape: f32[16,64], index: 0, kind: input, shape index: {}]
  %s1 = inlined_call_operand.hbm [shape: f32[16,16], index: 1, kind: input, shape index: {}]
  %s2 = inlined_call_operand.vmem [shape: f32[16,8], index: 2, kind: input, shape index: {}]
  %s3 = inlined_call_operand.vmem [shape: f32[32,16], index: 3, kind: input, shape index: {}]
  %s4 = inlined_call_operand.hbm [shape: f32[32,32], index: 4, kind: input, shape index: {}]
  %s5 = inlined_call_operand.vmem [shape: f32[64,128], index: 5, kind: input, shape index: {}]
  %s6 = inlined_call_operand.vmem [shape: f32[128,256], index: 6, kind: input, shape index: {}]
  %s7 = inlined_call_operand.vmem [shape: f32[128,256], index: 7, kind: input, shape index: {}]
  %s8 = inlined_call_operand.vmem [shape: f32[16,128], index: 8, kind: input, shape index: {}]
  %s9 = inlined_call_operand.vmem [shape: f32[32,128], index: 9, kind: input, shape index: {}]
  %s10 = inlined_call_operand.hbm [shape: f32[128,640], index: 10, kind: input, shape index: {}]
  %s11 = inlined_call_operand.hbm [shape: f32[128,640], index: 11, kind: input, shape index: {}]
  %s12 = inlined_call_operand.hbm [shape: f32[16,128], index: 12, kind: output, shape index: {0}]
  %s13 = inlined_call_operand.hbm [shape: f32[16,128], index: 13, kind: output, shape index: {1}]
  %s14 = inlined_call_operand.hbm [shape: f32[16,128], index: 14, kind: output, shape index: {2}]
  %15 = xla_tuple %s12, %s13, %s14
  %s16 = sld [smem:[#allocation0]]
  $region90: #{encoder_forward.1} parent=0
    _
  %s18 = ssub.s32 1, %s16
  %s19 = scalar_select 0, %s18, %s16
  $region1: #{encoder_forward.1} parent=0
    #allocation2 [shape = 'u8[8192]{0}', space=vmem, size = 0x2000, scoped, tag = 'input window, operand 1, single buffered']
    #allocation3 [shape = 's32[1]{0}', space=sflag, size = 0x4, scoped, tag = 'scoped memory for encoder_forward.1']
    #allocation4 [shape = 's32[1]{0}', space=sflag, size = 0x4, scoped, tag = 'scoped memory for encoder_forward.1']
    #allocation5 [shape = 'u8[16384]{0}', space=vmem, size = 0x4000, scoped, tag = 'input window, operand 4, single buffered']
    #allocation6 [shape = 's32[1]{0}', space=sflag, size = 0x4, scoped, tag = 'scoped memory for encoder_forward.1']
    #allocation7 [shape = 'u8[327680]{0}', space=vmem, size = 0x50000, scoped, tag = 'input window, operand 10, single buffered']
    #allocation8 [shape = 'u8[327680]{0}', space=vmem, size = 0x50000, scoped, tag = 'input window, operand 11, single buffered']
    #allocation9 [shape = 's32[1]{0}', space=sflag, size = 0x4, scoped, tag = 'scoped memory for encoder_forward.1']
    #allocation10 [shape = 'u8[8192]{0}', space=vmem, size = 0x2000, scoped, tag = 'output window, operand 0, single buffered']
    #allocation11 [shape = 'u8[8192]{0}', space=vmem, size = 0x2000, scoped, tag = 'output window, operand 1, single buffered']
    #allocation12 [shape = 's32[1]{0}', space=sflag, size = 0x4, scoped, tag = 'scoped memory for encoder_forward.1']
    #allocation13 [shape = 'u8[8192]{0}', space=vmem, size = 0x2000, scoped, tag = 'output window, operand 2, single buffered']
    %20 = vsyncpa [#allocation3], 0
    %21 = vsyncpa [#allocation6], 0
    %22 = vsyncpa [#allocation9], 0
    %23 = vsyncpa [#allocation4], 0
    %24 = vsyncpa [#allocation12], 0
    // Predicated region
    $region2: #{encoder_forward.1} parent=1 // pred_check
      _
    $region3: #{encoder_forward.1} parent=1 // pred_check_branch
      %26 = sbr.rel (0) target = $region5
    $region4: #{encoder_forward.1} parent=1 // pred_region
      _
    $region5: #{encoder_forward.1} parent=1 // pred_fallthru
      _
    // Predicated region
    $region6: #{encoder_forward.1} parent=1 // pred_check
      _
    $region7: #{encoder_forward.1} parent=1 // pred_check_branch
      %28 = sbr.rel (0) target = $region9
    $region8: #{encoder_forward.1} parent=1 // pred_region
      %s30 = ssub.s32 256, 256
      %31 = vsyncadd [#allocation3], %s30
      %s32 = sshll.u32 [#allocation2], 4
      %s33 = int_to_ptr.vmem [resolvable:$true] %s32
      %38 = dma.hbm_to_vmem [thread:$0]  %s1, 256, %s33, [#allocation3], 128, 128, 8
    $region9: #{encoder_forward.1} parent=1 // pred_fallthru
      _
    // Predicated region
    $region10: #{encoder_forward.1} parent=1 // pred_check
      _
    $region11: #{encoder_forward.1} parent=1 // pred_check_branch
      %40 = sbr.rel (0) target = $region13
    $region12: #{encoder_forward.1} parent=1 // pred_region
      _
    $region13: #{encoder_forward.1} parent=1 // pred_fallthru
      _
    // Predicated region
    $region14: #{encoder_forward.1} parent=1 // pred_check
      _
    $region15: #{encoder_forward.1} parent=1 // pred_check_branch
      %42 = sbr.rel (0) target = $region17
    $region16: #{encoder_forward.1} parent=1 // pred_region
      _
    $region17: #{encoder_forward.1} parent=1 // pred_fallthru
      _
    // Predicated region
    $region18: #{encoder_forward.1} parent=1 // pred_check
      _
    $region19: #{encoder_forward.1} parent=1 // pred_check_branch
      %44 = sbr.rel (0) target = $region21
    $region20: #{encoder_forward.1} parent=1 // pred_region
      %s46 = ssub.s32 512, 512
      %47 = vsyncadd [#allocation6], %s46
      %s48 = sshll.u32 [#allocation5], 4
      %s49 = int_to_ptr.vmem [resolvable:$true] %s48
      %54 = dma.hbm_to_vmem [thread:$0]  %s4, 512, %s49, [#allocation6], 128, 128, 8
    $region21: #{encoder_forward.1} parent=1 // pred_fallthru
      _
    // Predicated region
    $region22: #{encoder_forward.1} parent=1 // pred_check
      _
    $region23: #{encoder_forward.1} parent=1 // pred_check_branch
      %56 = sbr.rel (0) target = $region25
    $region24: #{encoder_forward.1} parent=1 // pred_region
      _
    $region25: #{encoder_forward.1} parent=1 // pred_fallthru
      _
    // Predicated region
    $region26: #{encoder_forward.1} parent=1 // pred_check
      _
    $region27: #{encoder_forward.1} parent=1 // pred_check_branch
      %58 = sbr.rel (0) target = $region29
    $region28: #{encoder_forward.1} parent=1 // pred_region
      _
    $region29: #{encoder_forward.1} parent=1 // pred_fallthru
      _
    // Predicated region
    $region30: #{encoder_forward.1} parent=1 // pred_check
      _
    $region31: #{encoder_forward.1} parent=1 // pred_check_branch
      %60 = sbr.rel (0) target = $region33
    $region32: #{encoder_forward.1} parent=1 // pred_region
      _
    $region33: #{encoder_forward.1} parent=1 // pred_fallthru
      _
    // Predicated region
    $region34: #{encoder_forward.1} parent=1 // pred_check
      _
    $region35: #{encoder_forward.1} parent=1 // pred_check_branch
      %62 = sbr.rel (0) target = $region37
    $region36: #{encoder_forward.1} parent=1 // pred_region
      _
    $region37: #{encoder_forward.1} parent=1 // pred_fallthru
      _
    // Predicated region
    $region38: #{encoder_forward.1} parent=1 // pred_check
      _
    $region39: #{encoder_forward.1} parent=1 // pred_check_branch
      %64 = sbr.rel (0) target = $region41
    $region40: #{encoder_forward.1} parent=1 // pred_region
      _
    $region41: #{encoder_forward.1} parent=1 // pred_fallthru
      _
    // Predicated region
    $region42: #{encoder_forward.1} parent=1 // pred_check
      _
    $region43: #{encoder_forward.1} parent=1 // pred_check_branch
      %66 = sbr.rel (0) target = $region45
    $region44: #{encoder_forward.1} parent=1 // pred_region
      %s68 = ssub.s32 10240, 10240
      %69 = vsyncadd [#allocation6], %s68
      %s70 = sshll.u32 [#allocation7], 4
      %s71 = int_to_ptr.vmem [resolvable:$true] %s70
      %76 = dma.hbm_to_vmem [thread:$0]  %s10, 10240, %s71, [#allocation6], 640, 640, 40
    $region45: #{encoder_forward.1} parent=1 // pred_fallthru
      _
    // Predicated region
    $region46: #{encoder_forward.1} parent=1 // pred_check
      _
    $region47: #{encoder_forward.1} parent=1 // pred_check_branch
      %78 = sbr.rel (0) target = $region49
    $region48: #{encoder_forward.1} parent=1 // pred_region
      %s80 = ssub.s32 10240, 10240
      %81 = vsyncadd [#allocation9], %s80
      %s82 = sshll.u32 [#allocation8], 4
      %s83 = int_to_ptr.vmem [resolvable:$true] %s82
      %88 = dma.hbm_to_vmem [thread:$0]  %s11, 10240, %s83, [#allocation9], 640, 640, 40
    $region49: #{encoder_forward.1} parent=1 // pred_fallthru
      _
    // Predicated region
    $region50: #{encoder_forward.1} parent=1 // pred_check
      _
    $region51: #{encoder_forward.1} parent=1 // pred_check_branch
      %90 = sbr.rel (0) target = $region53
    $region52: #{encoder_forward.1} parent=1 // pred_region
      %91 = dma.done [#allocation3], 256
    $region53: #{encoder_forward.1} parent=1 // pred_fallthru
      _
    // Predicated region
    $region54: #{encoder_forward.1} parent=1 // pred_check
      _
    $region55: #{encoder_forward.1} parent=1 // pred_check_branch
      %93 = sbr.rel (0) target = $region57
    $region56: #{encoder_forward.1} parent=1 // pred_region
      %94 = dma.done [#allocation6], 512
    $region57: #{encoder_forward.1} parent=1 // pred_fallthru
      _
    // Predicated region
    $region58: #{encoder_forward.1} parent=1 // pred_check
      _
    $region59: #{encoder_forward.1} parent=1 // pred_check_branch
      %96 = sbr.rel (0) target = $region61
    $region60: #{encoder_forward.1} parent=1 // pred_region
      %97 = dma.done [#allocation6], 10240
    $region61: #{encoder_forward.1} parent=1 // pred_fallthru
      _
    // Predicated region
    $region62: #{encoder_forward.1} parent=1 // pred_check
      _
    $region63: #{encoder_forward.1} parent=1 // pred_check_branch
      %99 = sbr.rel (0) target = $region65
    $region64: #{encoder_forward.1} parent=1 // pred_region
      %100 = dma.done [#allocation9], 10240
    $region65: #{encoder_forward.1} parent=1 // pred_fallthru
      _
    %v101 = vld [vmem:[#allocation2] sm:$0xff]
    %v102 = vld [vmem:[#allocation2 + $0x8] sm:$0xff]
    %v103 = vld [vmem:[%s2] sm:$0xff]
    %v104 = vld [vmem:[%s2 + $0x8] sm:$0xff]
    %v105 = vld [vmem:[%s3] sm:$0xff]
    %v106 = vld [vmem:[%s3 + $0x8] sm:$0xff]
    %v107 = vld [vmem:[%s3 + $0x10] sm:$0xff]
    %v108 = vld [vmem:[%s3 + $0x18] sm:$0xff]
    %v109 = vld [vmem:[#allocation5] sm:$0xff]
    %v110 = vld [vmem:[#allocation5 + $0x8] sm:$0xff]
    %v111 = vld [vmem:[#allocation5 + $0x10] sm:$0xff]
    %v112 = vld [vmem:[#allocation5 + $0x18] sm:$0xff]
    %v113 = vld [vmem:[%s0] sm:$0xff]
    %v114 = vld [vmem:[%s0 + $0x8] sm:$0xff]
    %v115 = vld [vmem:[%s5] sm:$0xff]
    %v116 = vld [vmem:[%s5 + $0x8] sm:$0xff]
    %v117 = vld [vmem:[%s5 + $0x10] sm:$0xff]
    %v118 = vld [vmem:[%s5 + $0x18] sm:$0xff]
    %v119 = vld [vmem:[%s5 + $0x20] sm:$0xff]
    %v120 = vld [vmem:[%s5 + $0x28] sm:$0xff]
    %v121 = vld [vmem:[%s5 + $0x30] sm:$0xff]
    %v122 = vld [vmem:[%s5 + $0x38] sm:$0xff]
    %vm123 = vcmask 523264
    %v125 = vsel %vm123, %v113, 0
    %v128 = vsel %vm123, %v114, 0
    %130 = vmatprep.subr.mxu0 0.0
    %131 = vmatpush1.msra.mxu0 0.0
    %132 = vmatprep.subr.mxu0 0.0
    %133 = vmatpush1.msra.mxu0 0.0
    %134 = vmatprep.subr.mxu0 0.0
    %135 = vmatpush1.msra.mxu0 0.0
    %136 = vmatprep.subr.mxu0 0.0
    %137 = vmatpush1.msra.mxu0 0.0
    %138 = vmatprep.subr.mxu0 0.0
    %139 = vmatpush1.msra.mxu0 0.0
    %140 = vmatprep.subr.mxu0 0.0
    %141 = vmatpush1.msra.mxu0 0.0
    %142 = vmatprep.subr.mxu0 0.0
    %143 = vmatpush1.msra.mxu0 0.0
    %144 = vmatprep.subr.mxu0 0.0
    %145 = vmatpush1.msra.mxu0 0.0
    %146 = vmatprep.subr.mxu0 0.0
    %147 = vmatpush1.msra.mxu0 %v122
    %148 = vmatprep.subr.mxu0 0.0
    %149 = vmatpush1.msra.mxu0 %v121
    %150 = vmatprep.subr.mxu0 0.0
    %151 = vmatpush1.msra.mxu0 %v120
    %152 = vmatprep.subr.mxu0 0.0
    %153 = vmatpush1.msra.mxu0 %v119
    %154 = vmatprep.subr.mxu0 0.0
    %155 = vmatpush1.msra.mxu0 %v118
    %156 = vmatprep.subr.mxu0 0.0
    %157 = vmatpush1.msra.mxu0 %v117
    %158 = vmatprep.subr.mxu0 0.0
    %159 = vmatpush1.msra.mxu0 %v116
    %160 = vmatprep.subr.mxu0 0.0
    %161 = vmatpush1.msra.mxu0 %v115
    %162 = vmatprep.subr.mxu0 0.0
    %163 = vmatpush2.msra.mxu0 0.0
    %164 = vmatprep.subr.mxu0 0.0
    %165 = vmatpush2.msra.mxu0 0.0
    %166 = vmatprep.subr.mxu0 0.0
    %167 = vmatpush2.msra.mxu0 0.0
    %168 = vmatprep.subr.mxu0 0.0
    %169 = vmatpush2.msra.mxu0 0.0
    %170 = vmatprep.subr.mxu0 0.0
    %171 = vmatpush2.msra.mxu0 0.0
    %172 = vmatprep.subr.mxu0 0.0
    %173 = vmatpush2.msra.mxu0 0.0
    %174 = vmatprep.subr.mxu0 0.0
    %175 = vmatpush2.msra.mxu0 0.0
    %176 = vmatprep.subr.mxu0 0.0
    %177 = vmatpush2.msra.mxu0 0.0
    %178 = vmatprep.subr.mxu0 0.0
    %179 = vmatpush2.msra.mxu0 0.0
    %180 = vmatprep.subr.mxu0 0.0
    %181 = vmatpush2.msra.mxu0 0.0
    %182 = vmatprep.subr.mxu0 0.0
    %183 = vmatpush2.msra.mxu0 0.0
    %184 = vmatprep.subr.mxu0 0.0
    %185 = vmatpush2.msra.mxu0 0.0
    %186 = vmatprep.subr.mxu0 0.0
    %187 = vmatpush2.msra.mxu0 0.0
    %188 = vmatprep.subr.mxu0 0.0
    %189 = vmatpush2.msra.mxu0 0.0
    %190 = vmatprep.subr.mxu0 0.0
    %191 = vmatpush2.msra.mxu0 0.0
    %192 = vmatprep.subr.mxu0 0.0
    %193 = vmatpush2.msra.mxu0 0.0
    %194 = vmatprep.mubr.f32.mxu0 0.0
    %195 = vmatmul.mubr.f32.gmra.mxu0 %v125
    %v196 = vpop.f32.mrf.mxu0
    %v197 = vadd.f32 0.0, %v196
    %v198 = vpop.f32.mrf.mxu0
    %199 = vmatprep.mubr.f32.mxu0 0.0
    %200 = vmatmul.mubr.f32.gmra.mxu0 %v128
    %v201 = vpop.f32.mrf.mxu0
    %v202 = vadd.f32 0.0, %v201
    %v203 = vpop.f32.mrf.mxu0
    %204 = vdwg.mxu0
    %205 = vst [vmem:[#allocation10] sm:$0xff] %v197
    %206 = vst [vmem:[#allocation10 + $0x8] sm:$0xff] %v202
    %v207 = vld [vmem:[%s6] sm:$0xff]
    %v208 = vld [vmem:[%s6 + $0x8] sm:$0xff]
    %v209 = vld [vmem:[%s6 + $0x10] sm:$0xff]
    %v210 = vld [vmem:[%s6 + $0x18] sm:$0xff]
    %v211 = vld [vmem:[%s6 + $0x20] sm:$0xff]
    %v212 = vld [vmem:[%s6 + $0x28] sm:$0xff]
    %v213 = vld [vmem:[%s6 + $0x30] sm:$0xff]
    %v214 = vld [vmem:[%s6 + $0x38] sm:$0xff]
    %v215 = vld [vmem:[%s6 + $0x40] sm:$0xff]
    %v216 = vld [vmem:[%s6 + $0x48] sm:$0xff]
    %v217 = vld [vmem:[%s6 + $0x50] sm:$0xff]
    %v218 = vld [vmem:[%s6 + $0x58] sm:$0xff]
    %v219 = vld [vmem:[%s6 + $0x60] sm:$0xff]
    %v220 = vld [vmem:[%s6 + $0x68] sm:$0xff]
    %v221 = vld [vmem:[%s6 + $0x70] sm:$0xff]
    %v222 = vld [vmem:[%s6 + $0x78] sm:$0xff]
    %v223 = vld [vmem:[%s6 + $0x80] sm:$0xff]
    %v224 = vld [vmem:[%s6 + $0x88] sm:$0xff]
    %v225 = vld [vmem:[%s6 + $0x90] sm:$0xff]
    %v226 = vld [vmem:[%s6 + $0x98] sm:$0xff]
    %v227 = vld [vmem:[%s6 + $0xa0] sm:$0xff]
    %v228 = vld [vmem:[%s6 + $0xa8] sm:$0xff]
    %v229 = vld [vmem:[%s6 + $0xb0] sm:$0xff]
    %v230 = vld [vmem:[%s6 + $0xb8] sm:$0xff]
    %v231 = vld [vmem:[%s6 + $0xc0] sm:$0xff]
    %v232 = vld [vmem:[%s6 + $0xc8] sm:$0xff]
    %v233 = vld [vmem:[%s6 + $0xd0] sm:$0xff]
    %v234 = vld [vmem:[%s6 + $0xd8] sm:$0xff]
    %v235 = vld [vmem:[%s6 + $0xe0] sm:$0xff]
    %v236 = vld [vmem:[%s6 + $0xe8] sm:$0xff]
    %v237 = vld [vmem:[%s6 + $0xf0] sm:$0xff]
    %v238 = vld [vmem:[%s6 + $0xf8] sm:$0xff]
    %239 = vmatprep.subr.mxu0 %v238
    %240 = vmatpush1.msra.mxu0 %v237
    %241 = vmatprep.subr.mxu0 %v236
    %242 = vmatpush1.msra.mxu0 %v235
    %243 = vmatprep.subr.mxu0 %v234
    %244 = vmatpush1.msra.mxu0 %v233
    %245 = vmatprep.subr.mxu0 %v232
    %246 = vmatpush1.msra.mxu0 %v231
    %247 = vmatprep.subr.mxu0 %v230
    %248 = vmatpush1.msra.mxu0 %v229
    %249 = vmatprep.subr.mxu0 %v228
    %250 = vmatpush1.msra.mxu0 %v227
    %251 = vmatprep.subr.mxu0 %v226
    %252 = vmatpush1.msra.mxu0 %v225
    %253 = vmatprep.subr.mxu0 %v224
    %254 = vmatpush1.msra.mxu0 %v223
    %255 = vmatprep.subr.mxu0 %v222
    %256 = vmatpush1.msra.mxu0 %v221
    %257 = vmatprep.subr.mxu0 %v220
    %258 = vmatpush1.msra.mxu0 %v219
    %259 = vmatprep.subr.mxu0 %v218
    %260 = vmatpush1.msra.mxu0 %v217
    %261 = vmatprep.subr.mxu0 %v216
    %262 = vmatpush1.msra.mxu0 %v215
    %263 = vmatprep.subr.mxu0 %v214
    %264 = vmatpush1.msra.mxu0 %v213
    %265 = vmatprep.subr.mxu0 %v212
    %266 = vmatpush1.msra.mxu0 %v211
    %267 = vmatprep.subr.mxu0 %v210
    %268 = vmatpush1.msra.mxu0 %v209
    %269 = vmatprep.subr.mxu0 %v208
    %270 = vmatpush1.msra.mxu0 %v207
    %271 = vmatprep.subr.mxu0 0.0
    %272 = vmatpush2.msra.mxu0 0.0
    %273 = vmatprep.subr.mxu0 0.0
    %274 = vmatpush2.msra.mxu0 0.0
    %275 = vmatprep.subr.mxu0 0.0
    %276 = vmatpush2.msra.mxu0 0.0
    %277 = vmatprep.subr.mxu0 0.0
    %278 = vmatpush2.msra.mxu0 0.0
    %279 = vmatprep.subr.mxu0 0.0
    %280 = vmatpush2.msra.mxu0 0.0
    %281 = vmatprep.subr.mxu0 0.0
    %282 = vmatpush2.msra.mxu0 0.0
    %283 = vmatprep.subr.mxu0 0.0
    %284 = vmatpush2.msra.mxu0 0.0
    %285 = vmatprep.subr.mxu0 0.0
    %286 = vmatpush2.msra.mxu0 0.0
    %287 = vmatprep.subr.mxu0 0.0
    %288 = vmatpush2.msra.mxu0 0.0
    %289 = vmatprep.subr.mxu0 0.0
    %290 = vmatpush2.msra.mxu0 0.0
    %291 = vmatprep.subr.mxu0 0.0
    %292 = vmatpush2.msra.mxu0 0.0
    %293 = vmatprep.subr.mxu0 0.0
    %294 = vmatpush2.msra.mxu0 0.0
    %295 = vmatprep.subr.mxu0 0.0
    %296 = vmatpush2.msra.mxu0 0.0
    %297 = vmatprep.subr.mxu0 0.0
    %298 = vmatpush2.msra.mxu0 0.0
    %299 = vmatprep.subr.mxu0 0.0
    %300 = vmatpush2.msra.mxu0 0.0
    %301 = vmatprep.subr.mxu0 0.0
    %302 = vmatpush2.msra.mxu0 0.0
    %303 = vmatprep.mubr.f32.mxu0 0.0
    %304 = vmatmul.mubr.f32.gmra.mxu0 %v197
    %v305 = vpop.f32.mrf.mxu0
    %v306 = vadd.f32 0.0, %v305
    %v307 = vpop.f32.mrf.mxu0
    %v308 = vadd.f32 0.0, %v307
    %309 = vmatprep.mubr.f32.mxu0 0.0
    %310 = vmatmul.mubr.f32.gmra.mxu0 %v202
    %v311 = vpop.f32.mrf.mxu0
    %v312 = vadd.f32 0.0, %v311
    %v313 = vpop.f32.mrf.mxu0
    %v314 = vadd.f32 0.0, %v313
    %315 = vdwg.mxu0
    %vm316 = vcmask 130048
    %v318 = vsel %vm316, %v101, 0
    %v321 = vsel %vm316, %v102, 0
    %323 = vmatprep.subr.mxu0 0.0
    %324 = vmatpush1.msra.mxu0 0.0
    %325 = vmatprep.subr.mxu0 0.0
    %326 = vmatpush1.msra.mxu0 0.0
    %327 = vmatprep.subr.mxu0 0.0
    %328 = vmatpush1.msra.mxu0 0.0
    %329 = vmatprep.subr.mxu0 0.0
    %330 = vmatpush1.msra.mxu0 0.0
    %331 = vmatprep.subr.mxu0 0.0
    %332 = vmatpush1.msra.mxu0 0.0
    %333 = vmatprep.subr.mxu0 0.0
    %334 = vmatpush1.msra.mxu0 0.0
    %335 = vmatprep.subr.mxu0 0.0
    %336 = vmatpush1.msra.mxu0 0.0
    %337 = vmatprep.subr.mxu0 0.0
    %338 = vmatpush1.msra.mxu0 0.0
    %339 = vmatprep.subr.mxu0 0.0
    %340 = vmatpush1.msra.mxu0 0.0
    %341 = vmatprep.subr.mxu0 0.0
    %342 = vmatpush1.msra.mxu0 0.0
    %343 = vmatprep.subr.mxu0 0.0
    %344 = vmatpush1.msra.mxu0 0.0
    %345 = vmatprep.subr.mxu0 0.0
    %346 = vmatpush1.msra.mxu0 0.0
    %347 = vmatprep.subr.mxu0 0.0
    %348 = vmatpush1.msra.mxu0 0.0
    %349 = vmatprep.subr.mxu0 0.0
    %350 = vmatpush1.msra.mxu0 0.0
    %351 = vmatprep.subr.mxu0 0.0
    %352 = vmatpush1.msra.mxu0 %v312
    %353 = vmatprep.subr.mxu0 0.0
    %354 = vmatpush1.msra.mxu0 %v306
    %355 = vmatprep.subr.mxu0 0.0
    %356 = vmatpush2.msra.mxu0 0.0
    %357 = vmatprep.subr.mxu0 0.0
    %358 = vmatpush2.msra.mxu0 0.0
    %359 = vmatprep.subr.mxu0 0.0
    %360 = vmatpush2.msra.mxu0 0.0
    %361 = vmatprep.subr.mxu0 0.0
    %362 = vmatpush2.msra.mxu0 0.0
    %363 = vmatprep.subr.mxu0 0.0
    %364 = vmatpush2.msra.mxu0 0.0
    %365 = vmatprep.subr.mxu0 0.0
    %366 = vmatpush2.msra.mxu0 0.0
    %367 = vmatprep.subr.mxu0 0.0
    %368 = vmatpush2.msra.mxu0 0.0
    %369 = vmatprep.subr.mxu0 0.0
    %370 = vmatpush2.msra.mxu0 0.0
    %371 = vmatprep.subr.mxu0 0.0
    %372 = vmatpush2.msra.mxu0 0.0
    %373 = vmatprep.subr.mxu0 0.0
    %374 = vmatpush2.msra.mxu0 0.0
    %375 = vmatprep.subr.mxu0 0.0
    %376 = vmatpush2.msra.mxu0 0.0
    %377 = vmatprep.subr.mxu0 0.0
    %378 = vmatpush2.msra.mxu0 0.0
    %379 = vmatprep.subr.mxu0 0.0
    %380 = vmatpush2.msra.mxu0 0.0
    %381 = vmatprep.subr.mxu0 0.0
    %382 = vmatpush2.msra.mxu0 0.0
    %383 = vmatprep.subr.mxu0 0.0
    %384 = vmatpush2.msra.mxu0 0.0
    %385 = vmatprep.subr.mxu0 0.0
    %386 = vmatpush2.msra.mxu0 0.0
    %387 = vmatprep.mubr.f32.mxu0 0.0
    %388 = vmatmul.mubr.f32.gmra.mxu0 %v318
    %v389 = vpop.f32.mrf.mxu0
    %v390 = vadd.f32 %v308, %v389
    %v391 = vpop.f32.mrf.mxu0
    %392 = vmatprep.mubr.f32.mxu0 0.0
    %393 = vmatmul.mubr.f32.gmra.mxu0 %v321
    %v394 = vpop.f32.mrf.mxu0
    %v395 = vadd.f32 %v314, %v394
    %v396 = vpop.f32.mrf.mxu0
    %397 = vdwg.mxu0
    %v398 = vadd.f32 %v390, 1e-06
    %v399 = vadd.f32 %v395, 1e-06
    %400 = vadd.xlane.f32.xlu0 %v398
    %v401 = vpop.xlane.xlu0 %400
    %402 = vadd.xlane.f32.xlu0 %v399
    %v403 = vpop.xlane.xlu0 %402
    %v404 = vrcp.pop 128.0
    %v405 = vmul.f32 %v401, %v404
    %v406 = vmul.f32 %v403, %v404
    %v407 = vsub.f32 %v398, %v405
    %v408 = vsub.f32 %v399, %v406
    %v409 = vmul.f32 %v407, %v407
    %v410 = vmul.f32 %v408, %v408
    %411 = vadd.xlane.f32.xlu0 %v409
    %v412 = vpop.xlane.xlu0 %411
    %413 = vadd.xlane.f32.xlu0 %v410
    %v414 = vpop.xlane.xlu0 %413
    %v415 = vmul.f32 %v412, %v404
    %v416 = vmul.f32 %v414, %v404
    %v417 = vadd.f32 %v415, 1e-05
    %v418 = vadd.f32 %v416, 1e-05
    %v419 = vrsqrt.pop %v417
    %v420 = vrsqrt.pop %v418
    %v421 = vmul.f32 %v407, %v419
    %v422 = vmul.f32 %v408, %v420
    %v423 = vld [vmem:[%s7] sm:$0xff]
    %v424 = vld [vmem:[%s7 + $0x8] sm:$0xff]
    %v425 = vld [vmem:[%s7 + $0x10] sm:$0xff]
    %v426 = vld [vmem:[%s7 + $0x18] sm:$0xff]
    %v427 = vld [vmem:[%s7 + $0x20] sm:$0xff]
    %v428 = vld [vmem:[%s7 + $0x28] sm:$0xff]
    %v429 = vld [vmem:[%s7 + $0x30] sm:$0xff]
    %v430 = vld [vmem:[%s7 + $0x38] sm:$0xff]
    %v431 = vld [vmem:[%s7 + $0x40] sm:$0xff]
    %v432 = vld [vmem:[%s7 + $0x48] sm:$0xff]
    %v433 = vld [vmem:[%s7 + $0x50] sm:$0xff]
    %v434 = vld [vmem:[%s7 + $0x58] sm:$0xff]
    %v435 = vld [vmem:[%s7 + $0x60] sm:$0xff]
    %v436 = vld [vmem:[%s7 + $0x68] sm:$0xff]
    %v437 = vld [vmem:[%s7 + $0x70] sm:$0xff]
    %v438 = vld [vmem:[%s7 + $0x78] sm:$0xff]
    %v439 = vld [vmem:[%s7 + $0x80] sm:$0xff]
    %v440 = vld [vmem:[%s7 + $0x88] sm:$0xff]
    %v441 = vld [vmem:[%s7 + $0x90] sm:$0xff]
    %v442 = vld [vmem:[%s7 + $0x98] sm:$0xff]
    %v443 = vld [vmem:[%s7 + $0xa0] sm:$0xff]
    %v444 = vld [vmem:[%s7 + $0xa8] sm:$0xff]
    %v445 = vld [vmem:[%s7 + $0xb0] sm:$0xff]
    %v446 = vld [vmem:[%s7 + $0xb8] sm:$0xff]
    %v447 = vld [vmem:[%s7 + $0xc0] sm:$0xff]
    %v448 = vld [vmem:[%s7 + $0xc8] sm:$0xff]
    %v449 = vld [vmem:[%s7 + $0xd0] sm:$0xff]
    %v450 = vld [vmem:[%s7 + $0xd8] sm:$0xff]
    %v451 = vld [vmem:[%s7 + $0xe0] sm:$0xff]
    %v452 = vld [vmem:[%s7 + $0xe8] sm:$0xff]
    %v453 = vld [vmem:[%s7 + $0xf0] sm:$0xff]
    %v454 = vld [vmem:[%s7 + $0xf8] sm:$0xff]
    %455 = vmatprep.subr.mxu0 %v454
    %456 = vmatpush1.msra.mxu0 %v453
    %457 = vmatprep.subr.mxu0 %v452
    %458 = vmatpush1.msra.mxu0 %v451
    %459 = vmatprep.subr.mxu0 %v450
    %460 = vmatpush1.msra.mxu0 %v449
    %461 = vmatprep.subr.mxu0 %v448
    %462 = vmatpush1.msra.mxu0 %v447
    %463 = vmatprep.subr.mxu0 %v446
    %464 = vmatpush1.msra.mxu0 %v445
    %465 = vmatprep.subr.mxu0 %v444
    %466 = vmatpush1.msra.mxu0 %v443
    %467 = vmatprep.subr.mxu0 %v442
    %468 = vmatpush1.msra.mxu0 %v441
    %469 = vmatprep.subr.mxu0 %v440
    %470 = vmatpush1.msra.mxu0 %v439
    %471 = vmatprep.subr.mxu0 %v438
    %472 = vmatpush1.msra.mxu0 %v437
    %473 = vmatprep.subr.mxu0 %v436
    %474 = vmatpush1.msra.mxu0 %v435
    %475 = vmatprep.subr.mxu0 %v434
    %476 = vmatpush1.msra.mxu0 %v433
    %477 = vmatprep.subr.mxu0 %v432
    %478 = vmatpush1.msra.mxu0 %v431
    %479 = vmatprep.subr.mxu0 %v430
    %480 = vmatpush1.msra.mxu0 %v429
    %481 = vmatprep.subr.mxu0 %v428
    %482 = vmatpush1.msra.mxu0 %v427
    %483 = vmatprep.subr.mxu0 %v426
    %484 = vmatpush1.msra.mxu0 %v425
    %485 = vmatprep.subr.mxu0 %v424
    %486 = vmatpush1.msra.mxu0 %v423
    %487 = vmatprep.subr.mxu0 0.0
    %488 = vmatpush2.msra.mxu0 0.0
    %489 = vmatprep.subr.mxu0 0.0
    %490 = vmatpush2.msra.mxu0 0.0
    %491 = vmatprep.subr.mxu0 0.0
    %492 = vmatpush2.msra.mxu0 0.0
    %493 = vmatprep.subr.mxu0 0.0
    %494 = vmatpush2.msra.mxu0 0.0
    %495 = vmatprep.subr.mxu0 0.0
    %496 = vmatpush2.msra.mxu0 0.0
    %497 = vmatprep.subr.mxu0 0.0
    %498 = vmatpush2.msra.mxu0 0.0
    %499 = vmatprep.subr.mxu0 0.0
    %500 = vmatpush2.msra.mxu0 0.0
    %501 = vmatprep.subr.mxu0 0.0
    %502 = vmatpush2.msra.mxu0 0.0
    %503 = vmatprep.subr.mxu0 0.0
    %504 = vmatpush2.msra.mxu0 0.0
    %505 = vmatprep.subr.mxu0 0.0
    %506 = vmatpush2.msra.mxu0 0.0
    %507 = vmatprep.subr.mxu0 0.0
    %508 = vmatpush2.msra.mxu0 0.0
    %509 = vmatprep.subr.mxu0 0.0
    %510 = vmatpush2.msra.mxu0 0.0
    %511 = vmatprep.subr.mxu0 0.0
    %512 = vmatpush2.msra.mxu0 0.0
    %513 = vmatprep.subr.mxu0 0.0
    %514 = vmatpush2.msra.mxu0 0.0
    %515 = vmatprep.subr.mxu0 0.0
    %516 = vmatpush2.msra.mxu0 0.0
    %517 = vmatprep.subr.mxu0 0.0
    %518 = vmatpush2.msra.mxu0 0.0
    %519 = vmatprep.mubr.f32.mxu0 0.0
    %520 = vmatmul.mubr.f32.gmra.mxu0 %v421
    %v521 = vpop.f32.mrf.mxu0
    %v522 = vadd.f32 0.0, %v521
    %v523 = vpop.f32.mrf.mxu0
    %v524 = vadd.f32 0.0, %v523
    %525 = vmatprep.mubr.f32.mxu0 0.0
    %526 = vmatmul.mubr.f32.gmra.mxu0 %v422
    %v527 = vpop.f32.mrf.mxu0
    %v528 = vadd.f32 0.0, %v527
    %v529 = vpop.f32.mrf.mxu0
    %v530 = vadd.f32 0.0, %v529
    %531 = vdwg.mxu0
    %532 = vmatprep.subr.mxu0 0.0
    %533 = vmatpush1.msra.mxu0 0.0
    %534 = vmatprep.subr.mxu0 0.0
    %535 = vmatpush1.msra.mxu0 0.0
    %536 = vmatprep.subr.mxu0 0.0
    %537 = vmatpush1.msra.mxu0 0.0
    %538 = vmatprep.subr.mxu0 0.0
    %539 = vmatpush1.msra.mxu0 0.0
    %540 = vmatprep.subr.mxu0 0.0
    %541 = vmatpush1.msra.mxu0 0.0
    %542 = vmatprep.subr.mxu0 0.0
    %543 = vmatpush1.msra.mxu0 0.0
    %544 = vmatprep.subr.mxu0 0.0
    %545 = vmatpush1.msra.mxu0 0.0
    %546 = vmatprep.subr.mxu0 0.0
    %547 = vmatpush1.msra.mxu0 0.0
    %548 = vmatprep.subr.mxu0 0.0
    %549 = vmatpush1.msra.mxu0 0.0
    %550 = vmatprep.subr.mxu0 0.0
    %551 = vmatpush1.msra.mxu0 0.0
    %552 = vmatprep.subr.mxu0 0.0
    %553 = vmatpush1.msra.mxu0 0.0
    %554 = vmatprep.subr.mxu0 0.0
    %555 = vmatpush1.msra.mxu0 0.0
    %556 = vmatprep.subr.mxu0 0.0
    %557 = vmatpush1.msra.mxu0 0.0
    %558 = vmatprep.subr.mxu0 0.0
    %559 = vmatpush1.msra.mxu0 0.0
    %560 = vmatprep.subr.mxu0 0.0
    %561 = vmatpush1.msra.mxu0 %v528
    %562 = vmatprep.subr.mxu0 0.0
    %563 = vmatpush1.msra.mxu0 %v522
    %564 = vmatprep.subr.mxu0 0.0
    %565 = vmatpush2.msra.mxu0 0.0
    %566 = vmatprep.subr.mxu0 0.0
    %567 = vmatpush2.msra.mxu0 0.0
    %568 = vmatprep.subr.mxu0 0.0
    %569 = vmatpush2.msra.mxu0 0.0
    %570 = vmatprep.subr.mxu0 0.0
    %571 = vmatpush2.msra.mxu0 0.0
    %572 = vmatprep.subr.mxu0 0.0
    %573 = vmatpush2.msra.mxu0 0.0
    %574 = vmatprep.subr.mxu0 0.0
    %575 = vmatpush2.msra.mxu0 0.0
    %576 = vmatprep.subr.mxu0 0.0
    %577 = vmatpush2.msra.mxu0 0.0
    %578 = vmatprep.subr.mxu0 0.0
    %579 = vmatpush2.msra.mxu0 0.0
    %580 = vmatprep.subr.mxu0 0.0
    %581 = vmatpush2.msra.mxu0 0.0
    %582 = vmatprep.subr.mxu0 0.0
    %583 = vmatpush2.msra.mxu0 0.0
    %584 = vmatprep.subr.mxu0 0.0
    %585 = vmatpush2.msra.mxu0 0.0
    %586 = vmatprep.subr.mxu0 0.0
    %587 = vmatpush2.msra.mxu0 0.0
    %588 = vmatprep.subr.mxu0 0.0
    %589 = vmatpush2.msra.mxu0 0.0
    %590 = vmatprep.subr.mxu0 0.0
    %591 = vmatpush2.msra.mxu0 0.0
    %592 = vmatprep.subr.mxu0 0.0
    %593 = vmatpush2.msra.mxu0 0.0
    %594 = vmatprep.subr.mxu0 0.0
    %595 = vmatpush2.msra.mxu0 0.0
    %596 = vmatprep.mubr.f32.mxu0 0.0
    %597 = vmatmul.mubr.f32.gmra.mxu0 %v318
    %v598 = vpop.f32.mrf.mxu0
    %v599 = vadd.f32 %v524, %v598
    %v600 = vpop.f32.mrf.mxu0
    %601 = vmatprep.mubr.f32.mxu0 0.0
    %602 = vmatmul.mubr.f32.gmra.mxu0 %v321
    %v603 = vpop.f32.mrf.mxu0
    %v604 = vadd.f32 %v530, %v603
    %v605 = vpop.f32.mrf.mxu0
    %606 = vdwg.mxu0
    %v607 = vadd.f32 %v599, 1e-06
    %v608 = vadd.f32 %v604, 1e-06
    %609 = vadd.xlane.f32.xlu0 %v607
    %v610 = vpop.xlane.xlu0 %609
    %611 = vadd.xlane.f32.xlu0 %v608
    %v612 = vpop.xlane.xlu0 %611
    %v613 = vmul.f32 %v610, %v404
    %v614 = vmul.f32 %v612, %v404
    %v615 = vsub.f32 %v607, %v613
    %v616 = vsub.f32 %v608, %v614
    %v617 = vmul.f32 %v615, %v615
    %v618 = vmul.f32 %v616, %v616
    %619 = vadd.xlane.f32.xlu0 %v617
    %v620 = vpop.xlane.xlu0 %619
    %621 = vadd.xlane.f32.xlu0 %v618
    %v622 = vpop.xlane.xlu0 %621
    %v623 = vmul.f32 %v620, %v404
    %v624 = vmul.f32 %v622, %v404
    %v625 = vadd.f32 %v623, 1e-05
    %v626 = vadd.f32 %v624, 1e-05
    %v627 = vrsqrt.pop %v625
    %v628 = vrsqrt.pop %v626
    %v629 = vmul.f32 %v615, %v627
    %v630 = vmul.f32 %v616, %v628
    %631 = vst [vmem:[#allocation11] sm:$0xff] %v629
    %632 = vst [vmem:[#allocation11 + $0x8] sm:$0xff] %v630
    %v633 = vld [vmem:[%s8] sm:$0xff]
    %v634 = vld [vmem:[%s8 + $0x8] sm:$0xff]
    %v635 = vld [vmem:[%s9] sm:$0xff]
    %v636 = vld [vmem:[%s9 + $0x8] sm:$0xff]
    %v637 = vld [vmem:[%s9 + $0x10] sm:$0xff]
    %v638 = vld [vmem:[%s9 + $0x18] sm:$0xff]
    %v639 = vld [vmem:[#allocation7] sm:$0xff]
    %v640 = vld [vmem:[#allocation7 + $0x8] sm:$0xff]
    %v641 = vld [vmem:[#allocation7 + $0x10] sm:$0xff]
    %v642 = vld [vmem:[#allocation7 + $0x18] sm:$0xff]
    %v643 = vld [vmem:[#allocation7 + $0x20] sm:$0xff]
    %v644 = vld [vmem:[#allocation7 + $0x28] sm:$0xff]
    %v645 = vld [vmem:[#allocation7 + $0x30] sm:$0xff]
    %v646 = vld [vmem:[#allocation7 + $0x38] sm:$0xff]
    %v647 = vld [vmem:[#allocation7 + $0x40] sm:$0xff]
    %v648 = vld [vmem:[#allocation7 + $0x48] sm:$0xff]
    %v649 = vld [vmem:[#allocation7 + $0x50] sm:$0xff]
    %v650 = vld [vmem:[#allocation7 + $0x58] sm:$0xff]
    %v651 = vld [vmem:[#allocation7 + $0x60] sm:$0xff]
    %v652 = vld [vmem:[#allocation7 + $0x68] sm:$0xff]
    %v653 = vld [vmem:[#allocation7 + $0x70] sm:$0xff]
    %v654 = vld [vmem:[#allocation7 + $0x78] sm:$0xff]
    %v655 = vld [vmem:[#allocation7 + $0x80] sm:$0xff]
    %v656 = vld [vmem:[#allocation7 + $0x88] sm:$0xff]
    %v657 = vld [vmem:[#allocation7 + $0x90] sm:$0xff]
    %v658 = vld [vmem:[#allocation7 + $0x98] sm:$0xff]
    %v659 = vld [vmem:[#allocation7 + $0xa0] sm:$0xff]
    %v660 = vld [vmem:[#allocation7 + $0xa8] sm:$0xff]
    %v661 = vld [vmem:[#allocation7 + $0xb0] sm:$0xff]
    %v662 = vld [vmem:[#allocation7 + $0xb8] sm:$0xff]
    %v663 = vld [vmem:[#allocation7 + $0xc0] sm:$0xff]
    %v664 = vld [vmem:[#allocation7 + $0xc8] sm:$0xff]
    %v665 = vld [vmem:[#allocation7 + $0xd0] sm:$0xff]
    %v666 = vld [vmem:[#allocation7 + $0xd8] sm:$0xff]
    %v667 = vld [vmem:[#allocation7 + $0xe0] sm:$0xff]
    %v668 = vld [vmem:[#allocation7 + $0xe8] sm:$0xff]
    %v669 = vld [vmem:[#allocation7 + $0xf0] sm:$0xff]
    %v670 = vld [vmem:[#allocation7 + $0xf8] sm:$0xff]
    %v671 = vld [vmem:[#allocation7 + $0x100] sm:$0xff]
    %v672 = vld [vmem:[#allocation7 + $0x108] sm:$0xff]
    %v673 = vld [vmem:[#allocation7 + $0x110] sm:$0xff]
    %v674 = vld [vmem:[#allocation7 + $0x118] sm:$0xff]
    %v675 = vld [vmem:[#allocation7 + $0x120] sm:$0xff]
    %v676 = vld [vmem:[#allocation7 + $0x128] sm:$0xff]
    %v677 = vld [vmem:[#allocation7 + $0x130] sm:$0xff]
    %v678 = vld [vmem:[#allocation7 + $0x138] sm:$0xff]
    %v679 = vld [vmem:[#allocation7 + $0x140] sm:$0xff]
    %v680 = vld [vmem:[#allocation7 + $0x148] sm:$0xff]
    %v681 = vld [vmem:[#allocation7 + $0x150] sm:$0xff]
    %v682 = vld [vmem:[#allocation7 + $0x158] sm:$0xff]
    %v683 = vld [vmem:[#allocation7 + $0x160] sm:$0xff]
    %v684 = vld [vmem:[#allocation7 + $0x168] sm:$0xff]
    %v685 = vld [vmem:[#allocation7 + $0x170] sm:$0xff]
    %v686 = vld [vmem:[#allocation7 + $0x178] sm:$0xff]
    %v687 = vld [vmem:[#allocation7 + $0x180] sm:$0xff]
    %v688 = vld [vmem:[#allocation7 + $0x188] sm:$0xff]
    %v689 = vld [vmem:[#allocation7 + $0x190] sm:$0xff]
    %v690 = vld [vmem:[#allocation7 + $0x198] sm:$0xff]
    %v691 = vld [vmem:[#allocation7 + $0x1a0] sm:$0xff]
    %v692 = vld [vmem:[#allocation7 + $0x1a8] sm:$0xff]
    %v693 = vld [vmem:[#allocation7 + $0x1b0] sm:$0xff]
    %v694 = vld [vmem:[#allocation7 + $0x1b8] sm:$0xff]
    %v695 = vld [vmem:[#allocation7 + $0x1c0] sm:$0xff]
    %v696 = vld [vmem:[#allocation7 + $0x1c8] sm:$0xff]
    %v697 = vld [vmem:[#allocation7 + $0x1d0] sm:$0xff]
    %v698 = vld [vmem:[#allocation7 + $0x1d8] sm:$0xff]
    %v699 = vld [vmem:[#allocation7 + $0x1e0] sm:$0xff]
    %v700 = vld [vmem:[#allocation7 + $0x1e8] sm:$0xff]
    %v701 = vld [vmem:[#allocation7 + $0x1f0] sm:$0xff]
    %v702 = vld [vmem:[#allocation7 + $0x1f8] sm:$0xff]
    %v703 = vld [vmem:[#allocation7 + $0x200] sm:$0xff]
    %v704 = vld [vmem:[#allocation7 + $0x208] sm:$0xff]
    %v705 = vld [vmem:[#allocation7 + $0x210] sm:$0xff]
    %v706 = vld [vmem:[#allocation7 + $0x218] sm:$0xff]
    %v707 = vld [vmem:[#allocation7 + $0x220] sm:$0xff]
    %v708 = vld [vmem:[#allocation7 + $0x228] sm:$0xff]
    %v709 = vld [vmem:[#allocation7 + $0x230] sm:$0xff]
    %v710 = vld [vmem:[#allocation7 + $0x238] sm:$0xff]
    %v711 = vld [vmem:[#allocation7 + $0x240] sm:$0xff]
    %v712 = vld [vmem:[#allocation7 + $0x248] sm:$0xff]
    %v713 = vld [vmem:[#allocation7 + $0x250] sm:$0xff]
    %v714 = vld [vmem:[#allocation7 + $0x258] sm:$0xff]
    %v715 = vld [vmem:[#allocation7 + $0x260] sm:$0xff]
    %v716 = vld [vmem:[#allocation7 + $0x268] sm:$0xff]
    %v717 = vld [vmem:[#allocation7 + $0x270] sm:$0xff]
    %v718 = vld [vmem:[#allocation7 + $0x278] sm:$0xff]
    %719 = vmatprep.subr.mxu0 %v715
    %720 = vmatpush1.msra.mxu0 %v714
    %721 = vmatprep.subr.mxu0 %v710
    %722 = vmatpush1.msra.mxu0 %v709
    %723 = vmatprep.subr.mxu0 %v705
    %724 = vmatpush1.msra.mxu0 %v704
    %725 = vmatprep.subr.mxu0 %v700
    %726 = vmatpush1.msra.mxu0 %v699
    %727 = vmatprep.subr.mxu0 %v695
    %728 = vmatpush1.msra.mxu0 %v694
    %729 = vmatprep.subr.mxu0 %v690
    %730 = vmatpush1.msra.mxu0 %v689
    %731 = vmatprep.subr.mxu0 %v685
    %732 = vmatpush1.msra.mxu0 %v684
    %733 = vmatprep.subr.mxu0 %v680
    %734 = vmatpush1.msra.mxu0 %v679
    %735 = vmatprep.subr.mxu0 %v675
    %736 = vmatpush1.msra.mxu0 %v674
    %737 = vmatprep.subr.mxu0 %v670
    %738 = vmatpush1.msra.mxu0 %v669
    %739 = vmatprep.subr.mxu0 %v665
    %740 = vmatpush1.msra.mxu0 %v664
    %741 = vmatprep.subr.mxu0 %v660
    %742 = vmatpush1.msra.mxu0 %v659
    %743 = vmatprep.subr.mxu0 %v655
    %744 = vmatpush1.msra.mxu0 %v654
    %745 = vmatprep.subr.mxu0 %v650
    %746 = vmatpush1.msra.mxu0 %v649
    %747 = vmatprep.subr.mxu0 %v645
    %748 = vmatpush1.msra.mxu0 %v644
    %749 = vmatprep.subr.mxu0 %v640
    %750 = vmatpush1.msra.mxu0 %v639
    %751 = vmatprep.subr.mxu0 0.0
    %752 = vmatpush2.msra.mxu0 0.0
    %753 = vmatprep.subr.mxu0 0.0
    %754 = vmatpush2.msra.mxu0 0.0
    %755 = vmatprep.subr.mxu0 0.0
    %756 = vmatpush2.msra.mxu0 0.0
    %757 = vmatprep.subr.mxu0 0.0
    %758 = vmatpush2.msra.mxu0 0.0
    %759 = vmatprep.subr.mxu0 0.0
    %760 = vmatpush2.msra.mxu0 0.0
    %761 = vmatprep.subr.mxu0 0.0
    %762 = vmatpush2.msra.mxu0 0.0
    %763 = vmatprep.subr.mxu0 0.0
    %764 = vmatpush2.msra.mxu0 0.0
    %765 = vmatprep.subr.mxu0 0.0
    %766 = vmatpush2.msra.mxu0 0.0
    %767 = vmatprep.subr.mxu0 0.0
    %768 = vmatpush2.msra.mxu0 0.0
    %769 = vmatprep.subr.mxu0 0.0
    %770 = vmatpush2.msra.mxu0 0.0
    %771 = vmatprep.subr.mxu0 0.0
    %772 = vmatpush2.msra.mxu0 0.0
    %773 = vmatprep.subr.mxu0 0.0
    %774 = vmatpush2.msra.mxu0 0.0
    %775 = vmatprep.subr.mxu0 0.0
    %776 = vmatpush2.msra.mxu0 0.0
    %777 = vmatprep.subr.mxu0 0.0
    %778 = vmatpush2.msra.mxu0 0.0
    %779 = vmatprep.subr.mxu0 0.0
    %780 = vmatpush2.msra.mxu0 0.0
    %781 = vmatprep.subr.mxu0 0.0
    %782 = vmatpush2.msra.mxu0 0.0
    %783 = vmatprep.mubr.f32.mxu0 0.0
    %784 = vmatmul.mubr.f32.gmra.mxu0 %v633
    %v785 = vpop.f32.mrf.mxu0
    %v786 = vadd.f32 0.0, %v785
    %v787 = vpop.f32.mrf.mxu0
    %v788 = vadd.f32 0.0, %v787
    %789 = vmatprep.mubr.f32.mxu0 0.0
    %790 = vmatmul.mubr.f32.gmra.mxu0 %v634
    %v791 = vpop.f32.mrf.mxu0
    %v792 = vadd.f32 0.0, %v791
    %v793 = vpop.f32.mrf.mxu0
    %v794 = vadd.f32 0.0, %v793
    %795 = vmatprep.mubr.f32.mxu0 0.0
    %796 = vmatmul.mubr.f32.gmra.mxu0 %v635
    %v797 = vpop.f32.mrf.mxu0
    %v798 = vpop.f32.mrf.mxu0
    %799 = vmatprep.mubr.f32.mxu0 0.0
    %800 = vmatmul.mubr.f32.gmra.mxu0 %v636
    %v801 = vpop.f32.mrf.mxu0
    %v802 = vpop.f32.mrf.mxu0
    %803 = vmatprep.mubr.f32.mxu0 0.0
    %804 = vmatmul.mubr.f32.gmra.mxu0 %v637
    %v805 = vpop.f32.mrf.mxu0
    %v806 = vpop.f32.mrf.mxu0
    %807 = vmatprep.mubr.f32.mxu0 0.0
    %808 = vmatmul.mubr.f32.gmra.mxu0 %v638
    %v809 = vpop.f32.mrf.mxu0
    %v810 = vpop.f32.mrf.mxu0
    %811 = vdwg.mxu0
    %812 = vmatprep.subr.mxu0 %v717
    %813 = vmatpush1.msra.mxu0 %v716
    %814 = vmatprep.subr.mxu0 %v712
    %815 = vmatpush1.msra.mxu0 %v711
    %816 = vmatprep.subr.mxu0 %v707
    %817 = vmatpush1.msra.mxu0 %v706
    %818 = vmatprep.subr.mxu0 %v702
    %819 = vmatpush1.msra.mxu0 %v701
    %820 = vmatprep.subr.mxu0 %v697
    %821 = vmatpush1.msra.mxu0 %v696
    %822 = vmatprep.subr.mxu0 %v692
    %823 = vmatpush1.msra.mxu0 %v691
    %824 = vmatprep.subr.mxu0 %v687
    %825 = vmatpush1.msra.mxu0 %v686
    %826 = vmatprep.subr.mxu0 %v682
    %827 = vmatpush1.msra.mxu0 %v681
    %828 = vmatprep.subr.mxu0 %v677
    %829 = vmatpush1.msra.mxu0 %v676
    %830 = vmatprep.subr.mxu0 %v672
    %831 = vmatpush1.msra.mxu0 %v671
    %832 = vmatprep.subr.mxu0 %v667
    %833 = vmatpush1.msra.mxu0 %v666
    %834 = vmatprep.subr.mxu0 %v662
    %835 = vmatpush1.msra.mxu0 %v661
    %836 = vmatprep.subr.mxu0 %v657
    %837 = vmatpush1.msra.mxu0 %v656
    %838 = vmatprep.subr.mxu0 %v652
    %839 = vmatpush1.msra.mxu0 %v651
    %840 = vmatprep.subr.mxu0 %v647
    %841 = vmatpush1.msra.mxu0 %v646
    %842 = vmatprep.subr.mxu0 %v642
    %843 = vmatpush1.msra.mxu0 %v641
    %844 = vmatprep.subr.mxu0 0.0
    %845 = vmatpush2.msra.mxu0 0.0
    %846 = vmatprep.subr.mxu0 0.0
    %847 = vmatpush2.msra.mxu0 0.0
    %848 = vmatprep.subr.mxu0 0.0
    %849 = vmatpush2.msra.mxu0 0.0
    %850 = vmatprep.subr.mxu0 0.0
    %851 = vmatpush2.msra.mxu0 0.0
    %852 = vmatprep.subr.mxu0 0.0
    %853 = vmatpush2.msra.mxu0 0.0
    %854 = vmatprep.subr.mxu0 0.0
    %855 = vmatpush2.msra.mxu0 0.0
    %856 = vmatprep.subr.mxu0 0.0
    %857 = vmatpush2.msra.mxu0 0.0
    %858 = vmatprep.subr.mxu0 0.0
    %859 = vmatpush2.msra.mxu0 0.0
    %860 = vmatprep.subr.mxu0 0.0
    %861 = vmatpush2.msra.mxu0 0.0
    %862 = vmatprep.subr.mxu0 0.0
    %863 = vmatpush2.msra.mxu0 0.0
    %864 = vmatprep.subr.mxu0 0.0
    %865 = vmatpush2.msra.mxu0 0.0
    %866 = vmatprep.subr.mxu0 0.0
    %867 = vmatpush2.msra.mxu0 0.0
    %868 = vmatprep.subr.mxu0 0.0
    %869 = vmatpush2.msra.mxu0 0.0
    %870 = vmatprep.subr.mxu0 0.0
    %871 = vmatpush2.msra.mxu0 0.0
    %872 = vmatprep.subr.mxu0 0.0
    %873 = vmatpush2.msra.mxu0 0.0
    %874 = vmatprep.subr.mxu0 0.0
    %875 = vmatpush2.msra.mxu0 0.0
    %876 = vmatprep.mubr.f32.mxu0 0.0
    %877 = vmatmul.mubr.f32.gmra.mxu0 %v633
    %v878 = vpop.f32.mrf.mxu0
    %v879 = vadd.f32 0.0, %v878
    %v880 = vpop.f32.mrf.mxu0
    %881 = vmatprep.mubr.f32.mxu0 0.0
    %882 = vmatmul.mubr.f32.gmra.mxu0 %v634
    %v883 = vpop.f32.mrf.mxu0
    %v884 = vadd.f32 0.0, %v883
    %v885 = vpop.f32.mrf.mxu0
    %886 = vmatprep.mubr.f32.mxu0 0.0
    %887 = vmatmul.mubr.f32.gmra.mxu0 %v635
    %v888 = vpop.f32.mrf.mxu0
    %v889 = vadd.f32 0.0, %v888
    %v890 = vpop.f32.mrf.mxu0
    %v891 = vadd.f32 0.0, %v890
    %892 = vmatprep.mubr.f32.mxu0 0.0
    %893 = vmatmul.mubr.f32.gmra.mxu0 %v636
    %v894 = vpop.f32.mrf.mxu0
    %v895 = vadd.f32 0.0, %v894
    %v896 = vpop.f32.mrf.mxu0
    %v897 = vadd.f32 0.0, %v896
    %898 = vmatprep.mubr.f32.mxu0 0.0
    %899 = vmatmul.mubr.f32.gmra.mxu0 %v637
    %v900 = vpop.f32.mrf.mxu0
    %v901 = vadd.f32 0.0, %v900
    %v902 = vpop.f32.mrf.mxu0
    %v903 = vadd.f32 0.0, %v902
    %904 = vmatprep.mubr.f32.mxu0 0.0
    %905 = vmatmul.mubr.f32.gmra.mxu0 %v638
    %v906 = vpop.f32.mrf.mxu0
    %v907 = vadd.f32 0.0, %v906
    %v908 = vpop.f32.mrf.mxu0
    %v909 = vadd.f32 0.0, %v908
    %910 = vdwg.mxu0
    %911 = vmatprep.subr.mxu0 0.0
    %912 = vmatpush1.msra.mxu0 %v718
    %913 = vmatprep.subr.mxu0 0.0
    %914 = vmatpush1.msra.mxu0 %v713
    %915 = vmatprep.subr.mxu0 0.0
    %916 = vmatpush1.msra.mxu0 %v708
    %917 = vmatprep.subr.mxu0 0.0
    %918 = vmatpush1.msra.mxu0 %v703
    %919 = vmatprep.subr.mxu0 0.0
    %920 = vmatpush1.msra.mxu0 %v698
    %921 = vmatprep.subr.mxu0 0.0
    %922 = vmatpush1.msra.mxu0 %v693
    %923 = vmatprep.subr.mxu0 0.0
    %924 = vmatpush1.msra.mxu0 %v688
    %925 = vmatprep.subr.mxu0 0.0
    %926 = vmatpush1.msra.mxu0 %v683
    %927 = vmatprep.subr.mxu0 0.0
    %928 = vmatpush1.msra.mxu0 %v678
    %929 = vmatprep.subr.mxu0 0.0
    %930 = vmatpush1.msra.mxu0 %v673
    %931 = vmatprep.subr.mxu0 0.0
    %932 = vmatpush1.msra.mxu0 %v668
    %933 = vmatprep.subr.mxu0 0.0
    %934 = vmatpush1.msra.mxu0 %v663
    %935 = vmatprep.subr.mxu0 0.0
    %936 = vmatpush1.msra.mxu0 %v658
    %937 = vmatprep.subr.mxu0 0.0
    %938 = vmatpush1.msra.mxu0 %v653
    %939 = vmatprep.subr.mxu0 0.0
    %940 = vmatpush1.msra.mxu0 %v648
    %941 = vmatprep.subr.mxu0 0.0
    %942 = vmatpush1.msra.mxu0 %v643
    %943 = vmatprep.subr.mxu0 0.0
    %944 = vmatpush2.msra.mxu0 0.0
    %945 = vmatprep.subr.mxu0 0.0
    %946 = vmatpush2.msra.mxu0 0.0
    %947 = vmatprep.subr.mxu0 0.0
    %948 = vmatpush2.msra.mxu0 0.0
    %949 = vmatprep.subr.mxu0 0.0
    %950 = vmatpush2.msra.mxu0 0.0
    %951 = vmatprep.subr.mxu0 0.0
    %952 = vmatpush2.msra.mxu0 0.0
    %953 = vmatprep.subr.mxu0 0.0
    %954 = vmatpush2.msra.mxu0 0.0
    %955 = vmatprep.subr.mxu0 0.0
    %956 = vmatpush2.msra.mxu0 0.0
    %957 = vmatprep.subr.mxu0 0.0
    %958 = vmatpush2.msra.mxu0 0.0
    %959 = vmatprep.subr.mxu0 0.0
    %960 = vmatpush2.msra.mxu0 0.0
    %961 = vmatprep.subr.mxu0 0.0
    %962 = vmatpush2.msra.mxu0 0.0
    %963 = vmatprep.subr.mxu0 0.0
    %964 = vmatpush2.msra.mxu0 0.0
    %965 = vmatprep.subr.mxu0 0.0
    %966 = vmatpush2.msra.mxu0 0.0
    %967 = vmatprep.subr.mxu0 0.0
    %968 = vmatpush2.msra.mxu0 0.0
    %969 = vmatprep.subr.mxu0 0.0
    %970 = vmatpush2.msra.mxu0 0.0
    %971 = vmatprep.subr.mxu0 0.0
    %972 = vmatpush2.msra.mxu0 0.0
    %973 = vmatprep.subr.mxu0 0.0
    %974 = vmatpush2.msra.mxu0 0.0
    %975 = vmatprep.mubr.f32.mxu0 0.0
    %976 = vmatmul.mubr.f32.gmra.mxu0 %v633
    %v977 = vpop.f32.mrf.mxu0
    %v978 = vpop.f32.mrf.mxu0
    %979 = vmatprep.mubr.f32.mxu0 0.0
    %980 = vmatmul.mubr.f32.gmra.mxu0 %v634
    %v981 = vpop.f32.mrf.mxu0
    %v982 = vpop.f32.mrf.mxu0
    %983 = vmatprep.mubr.f32.mxu0 0.0
    %984 = vmatmul.mubr.f32.gmra.mxu0 %v635
    %v985 = vpop.f32.mrf.mxu0
    %v986 = vadd.f32 0.0, %v985
    %v987 = vpop.f32.mrf.mxu0
    %988 = vmatprep.mubr.f32.mxu0 0.0
    %989 = vmatmul.mubr.f32.gmra.mxu0 %v636
    %v990 = vpop.f32.mrf.mxu0
    %v991 = vpop.f32.mrf.mxu0
    %992 = vmatprep.mubr.f32.mxu0 0.0
    %993 = vmatmul.mubr.f32.gmra.mxu0 %v637
    %v994 = vpop.f32.mrf.mxu0
    %v995 = vpop.f32.mrf.mxu0
    %996 = vmatprep.mubr.f32.mxu0 0.0
    %997 = vmatmul.mubr.f32.gmra.mxu0 %v638
    %v998 = vpop.f32.mrf.mxu0
    %v999 = vpop.f32.mrf.mxu0
    %1000 = vdwg.mxu0
    %vm1001 = vcmask 64512
    %v1003 = vsel %vm1001, %v103, 0
    %v1006 = vsel %vm1001, %v104, 0
    %1008 = vmatprep.subr.mxu0 0.0
    %1009 = vmatpush1.msra.mxu0 0.0
    %1010 = vmatprep.subr.mxu0 0.0
    %1011 = vmatpush1.msra.mxu0 0.0
    %1012 = vmatprep.subr.mxu0 0.0
    %1013 = vmatpush1.msra.mxu0 0.0
    %1014 = vmatprep.subr.mxu0 0.0
    %1015 = vmatpush1.msra.mxu0 0.0
    %1016 = vmatprep.subr.mxu0 0.0
    %1017 = vmatpush1.msra.mxu0 0.0
    %1018 = vmatprep.subr.mxu0 0.0
    %1019 = vmatpush1.msra.mxu0 0.0
    %1020 = vmatprep.subr.mxu0 0.0
    %1021 = vmatpush1.msra.mxu0 0.0
    %1022 = vmatprep.subr.mxu0 0.0
    %1023 = vmatpush1.msra.mxu0 0.0
    %1024 = vmatprep.subr.mxu0 0.0
    %1025 = vmatpush1.msra.mxu0 0.0
    %1026 = vmatprep.subr.mxu0 0.0
    %1027 = vmatpush1.msra.mxu0 0.0
    %1028 = vmatprep.subr.mxu0 0.0
    %1029 = vmatpush1.msra.mxu0 0.0
    %1030 = vmatprep.subr.mxu0 0.0
    %1031 = vmatpush1.msra.mxu0 0.0
    %1032 = vmatprep.subr.mxu0 0.0
    %1033 = vmatpush1.msra.mxu0 0.0
    %1034 = vmatprep.subr.mxu0 0.0
    %1035 = vmatpush1.msra.mxu0 0.0
    %1036 = vmatprep.subr.mxu0 0.0
    %1037 = vmatpush1.msra.mxu0 0.0
    %1038 = vmatprep.subr.mxu0 0.0
    %1039 = vmatpush1.msra.mxu0 %v986
    %1040 = vmatprep.subr.mxu0 0.0
    %1041 = vmatpush2.msra.mxu0 0.0
    %1042 = vmatprep.subr.mxu0 0.0
    %1043 = vmatpush2.msra.mxu0 0.0
    %1044 = vmatprep.subr.mxu0 0.0
    %1045 = vmatpush2.msra.mxu0 0.0
    %1046 = vmatprep.subr.mxu0 0.0
    %1047 = vmatpush2.msra.mxu0 0.0
    %1048 = vmatprep.subr.mxu0 0.0
    %1049 = vmatpush2.msra.mxu0 0.0
    %1050 = vmatprep.subr.mxu0 0.0
    %1051 = vmatpush2.msra.mxu0 0.0
    %1052 = vmatprep.subr.mxu0 0.0
    %1053 = vmatpush2.msra.mxu0 0.0
    %1054 = vmatprep.subr.mxu0 0.0
    %1055 = vmatpush2.msra.mxu0 0.0
    %1056 = vmatprep.subr.mxu0 0.0
    %1057 = vmatpush2.msra.mxu0 0.0
    %1058 = vmatprep.subr.mxu0 0.0
    %1059 = vmatpush2.msra.mxu0 0.0
    %1060 = vmatprep.subr.mxu0 0.0
    %1061 = vmatpush2.msra.mxu0 0.0
    %1062 = vmatprep.subr.mxu0 0.0
    %1063 = vmatpush2.msra.mxu0 0.0
    %1064 = vmatprep.subr.mxu0 0.0
    %1065 = vmatpush2.msra.mxu0 0.0
    %1066 = vmatprep.subr.mxu0 0.0
    %1067 = vmatpush2.msra.mxu0 0.0
    %1068 = vmatprep.subr.mxu0 0.0
    %1069 = vmatpush2.msra.mxu0 0.0
    %1070 = vmatprep.subr.mxu0 0.0
    %1071 = vmatpush2.msra.mxu0 0.0
    %1072 = vmatprep.mubr.f32.mxu0 0.0
    %1073 = vmatmul.mubr.f32.gmra.mxu0 %v1003
    %v1074 = vpop.f32.mrf.mxu0
    %v1075 = vadd.f32 0.0, %v1074
    %v1076 = vpop.f32.mrf.mxu0
    %1077 = vmatprep.mubr.f32.mxu0 0.0
    %1078 = vmatmul.mubr.f32.gmra.mxu0 %v1006
    %v1079 = vpop.f32.mrf.mxu0
    %v1080 = vadd.f32 0.0, %v1079
    %v1081 = vpop.f32.mrf.mxu0
    %1082 = vdwg.mxu0
    %1083 = vmatprep.subr.mxu0 0.0
    %1084 = vmatpush1.msra.mxu0 0.0
    %1085 = vmatprep.subr.mxu0 0.0
    %1086 = vmatpush1.msra.mxu0 0.0
    %1087 = vmatprep.subr.mxu0 0.0
    %1088 = vmatpush1.msra.mxu0 0.0
    %1089 = vmatprep.subr.mxu0 0.0
    %1090 = vmatpush1.msra.mxu0 0.0
    %1091 = vmatprep.subr.mxu0 0.0
    %1092 = vmatpush1.msra.mxu0 0.0
    %1093 = vmatprep.subr.mxu0 0.0
    %1094 = vmatpush1.msra.mxu0 0.0
    %1095 = vmatprep.subr.mxu0 0.0
    %1096 = vmatpush1.msra.mxu0 0.0
    %1097 = vmatprep.subr.mxu0 0.0
    %1098 = vmatpush1.msra.mxu0 0.0
    %1099 = vmatprep.subr.mxu0 0.0
    %1100 = vmatpush1.msra.mxu0 0.0
    %1101 = vmatprep.subr.mxu0 0.0
    %1102 = vmatpush1.msra.mxu0 0.0
    %1103 = vmatprep.subr.mxu0 0.0
    %1104 = vmatpush1.msra.mxu0 0.0
    %1105 = vmatprep.subr.mxu0 0.0
    %1106 = vmatpush1.msra.mxu0 0.0
    %1107 = vmatprep.subr.mxu0 0.0
    %1108 = vmatpush1.msra.mxu0 0.0
    %1109 = vmatprep.subr.mxu0 0.0
    %1110 = vmatpush1.msra.mxu0 0.0
    %1111 = vmatprep.subr.mxu0 0.0
    %1112 = vmatpush1.msra.mxu0 %v792
    %1113 = vmatprep.subr.mxu0 0.0
    %1114 = vmatpush1.msra.mxu0 %v786
    %1115 = vmatprep.subr.mxu0 0.0
    %1116 = vmatpush2.msra.mxu0 0.0
    %1117 = vmatprep.subr.mxu0 0.0
    %1118 = vmatpush2.msra.mxu0 0.0
    %1119 = vmatprep.subr.mxu0 0.0
    %1120 = vmatpush2.msra.mxu0 0.0
    %1121 = vmatprep.subr.mxu0 0.0
    %1122 = vmatpush2.msra.mxu0 0.0
    %1123 = vmatprep.subr.mxu0 0.0
    %1124 = vmatpush2.msra.mxu0 0.0
    %1125 = vmatprep.subr.mxu0 0.0
    %1126 = vmatpush2.msra.mxu0 0.0
    %1127 = vmatprep.subr.mxu0 0.0
    %1128 = vmatpush2.msra.mxu0 0.0
    %1129 = vmatprep.subr.mxu0 0.0
    %1130 = vmatpush2.msra.mxu0 0.0
    %1131 = vmatprep.subr.mxu0 0.0
    %1132 = vmatpush2.msra.mxu0 0.0
    %1133 = vmatprep.subr.mxu0 0.0
    %1134 = vmatpush2.msra.mxu0 0.0
    %1135 = vmatprep.subr.mxu0 0.0
    %1136 = vmatpush2.msra.mxu0 0.0
    %1137 = vmatprep.subr.mxu0 0.0
    %1138 = vmatpush2.msra.mxu0 0.0
    %1139 = vmatprep.subr.mxu0 0.0
    %1140 = vmatpush2.msra.mxu0 0.0
    %1141 = vmatprep.subr.mxu0 0.0
    %1142 = vmatpush2.msra.mxu0 0.0
    %1143 = vmatprep.subr.mxu0 0.0
    %1144 = vmatpush2.msra.mxu0 0.0
    %1145 = vmatprep.subr.mxu0 0.0
    %1146 = vmatpush2.msra.mxu0 0.0
    %1147 = vmatprep.mubr.f32.mxu0 0.0
    %1148 = vmatmul.mubr.f32.gmra.mxu0 %v318
    %v1149 = vpop.f32.mrf.mxu0
    %v1150 = vadd.f32 %v1075, %v1149
    %v1151 = vpop.f32.mrf.mxu0
    %1152 = vmatprep.mubr.f32.mxu0 0.0
    %1153 = vmatmul.mubr.f32.gmra.mxu0 %v321
    %v1154 = vpop.f32.mrf.mxu0
    %v1155 = vadd.f32 %v1080, %v1154
    %v1156 = vpop.f32.mrf.mxu0
    %1157 = vdwg.mxu0
    %v1158 = vadd.f32 %v1150, %v879
    %v1159 = vadd.f32 %v1155, %v884
    %v1160 = vadd.f32 %v1158, 1e-06
    %v1161 = vadd.f32 %v1159, 1e-06
    %1162 = vadd.xlane.f32.xlu0 %v1160
    %v1163 = vpop.xlane.xlu0 %1162
    %1164 = vadd.xlane.f32.xlu0 %v1161
    %v1165 = vpop.xlane.xlu0 %1164
    %v1166 = vmul.f32 %v1163, %v404
    %v1167 = vmul.f32 %v1165, %v404
    %v1168 = vsub.f32 %v1160, %v1166
    %v1169 = vsub.f32 %v1161, %v1167
    %v1170 = vmul.f32 %v1168, %v1168
    %v1171 = vmul.f32 %v1169, %v1169
    %1172 = vadd.xlane.f32.xlu0 %v1170
    %v1173 = vpop.xlane.xlu0 %1172
    %1174 = vadd.xlane.f32.xlu0 %v1171
    %v1175 = vpop.xlane.xlu0 %1174
    %v1176 = vmul.f32 %v1173, %v404
    %v1177 = vmul.f32 %v1175, %v404
    %v1178 = vadd.f32 %v1176, 1e-05
    %v1179 = vadd.f32 %v1177, 1e-05
    %v1180 = vrsqrt.pop %v1178
    %v1181 = vrsqrt.pop %v1179
    %v1182 = vmul.f32 %v1168, %v1180
    %v1183 = vmul.f32 %v1169, %v1181
    %v1185 = vsel %vm316, %v105, 0
    %v1188 = vsel %vm316, %v106, 0
    %v1191 = vsel %vm316, %v107, 0
    %v1194 = vsel %vm316, %v108, 0
    %1196 = vmatprep.subr.mxu0 0.0
    %1197 = vmatpush1.msra.mxu0 0.0
    %1198 = vmatprep.subr.mxu0 0.0
    %1199 = vmatpush1.msra.mxu0 0.0
    %1200 = vmatprep.subr.mxu0 0.0
    %1201 = vmatpush1.msra.mxu0 0.0
    %1202 = vmatprep.subr.mxu0 0.0
    %1203 = vmatpush1.msra.mxu0 0.0
    %1204 = vmatprep.subr.mxu0 0.0
    %1205 = vmatpush1.msra.mxu0 0.0
    %1206 = vmatprep.subr.mxu0 0.0
    %1207 = vmatpush1.msra.mxu0 0.0
    %1208 = vmatprep.subr.mxu0 0.0
    %1209 = vmatpush1.msra.mxu0 0.0
    %1210 = vmatprep.subr.mxu0 0.0
    %1211 = vmatpush1.msra.mxu0 0.0
    %1212 = vmatprep.subr.mxu0 0.0
    %1213 = vmatpush1.msra.mxu0 0.0
    %1214 = vmatprep.subr.mxu0 0.0
    %1215 = vmatpush1.msra.mxu0 0.0
    %1216 = vmatprep.subr.mxu0 0.0
    %1217 = vmatpush1.msra.mxu0 0.0
    %1218 = vmatprep.subr.mxu0 0.0
    %1219 = vmatpush1.msra.mxu0 0.0
    %1220 = vmatprep.subr.mxu0 0.0
    %1221 = vmatpush1.msra.mxu0 0.0
    %1222 = vmatprep.subr.mxu0 0.0
    %1223 = vmatpush1.msra.mxu0 0.0
    %1224 = vmatprep.subr.mxu0 0.0
    %1225 = vmatpush1.msra.mxu0 %v794
    %1226 = vmatprep.subr.mxu0 0.0
    %1227 = vmatpush1.msra.mxu0 %v788
    %1228 = vmatprep.subr.mxu0 0.0
    %1229 = vmatpush2.msra.mxu0 0.0
    %1230 = vmatprep.subr.mxu0 0.0
    %1231 = vmatpush2.msra.mxu0 0.0
    %1232 = vmatprep.subr.mxu0 0.0
    %1233 = vmatpush2.msra.mxu0 0.0
    %1234 = vmatprep.subr.mxu0 0.0
    %1235 = vmatpush2.msra.mxu0 0.0
    %1236 = vmatprep.subr.mxu0 0.0
    %1237 = vmatpush2.msra.mxu0 0.0
    %1238 = vmatprep.subr.mxu0 0.0
    %1239 = vmatpush2.msra.mxu0 0.0
    %1240 = vmatprep.subr.mxu0 0.0
    %1241 = vmatpush2.msra.mxu0 0.0
    %1242 = vmatprep.subr.mxu0 0.0
    %1243 = vmatpush2.msra.mxu0 0.0
    %1244 = vmatprep.subr.mxu0 0.0
    %1245 = vmatpush2.msra.mxu0 0.0
    %1246 = vmatprep.subr.mxu0 0.0
    %1247 = vmatpush2.msra.mxu0 0.0
    %1248 = vmatprep.subr.mxu0 0.0
    %1249 = vmatpush2.msra.mxu0 0.0
    %1250 = vmatprep.subr.mxu0 0.0
    %1251 = vmatpush2.msra.mxu0 0.0
    %1252 = vmatprep.subr.mxu0 0.0
    %1253 = vmatpush2.msra.mxu0 0.0
    %1254 = vmatprep.subr.mxu0 0.0
    %1255 = vmatpush2.msra.mxu0 0.0
    %1256 = vmatprep.subr.mxu0 0.0
    %1257 = vmatpush2.msra.mxu0 0.0
    %1258 = vmatprep.subr.mxu0 0.0
    %1259 = vmatpush2.msra.mxu0 0.0
    %1260 = vmatprep.mubr.f32.mxu0 0.0
    %1261 = vmatmul.mubr.f32.gmra.mxu0 %v1185
    %v1262 = vpop.f32.mrf.mxu0
    %v1263 = vadd.f32 0.0, %v1262
    %v1264 = vpop.f32.mrf.mxu0
    %1265 = vmatprep.mubr.f32.mxu0 0.0
    %1266 = vmatmul.mubr.f32.gmra.mxu0 %v1188
    %v1267 = vpop.f32.mrf.mxu0
    %v1268 = vadd.f32 0.0, %v1267
    %v1269 = vpop.f32.mrf.mxu0
    %1270 = vmatprep.mubr.f32.mxu0 0.0
    %1271 = vmatmul.mubr.f32.gmra.mxu0 %v1191
    %v1272 = vpop.f32.mrf.mxu0
    %v1273 = vadd.f32 0.0, %v1272
    %v1274 = vpop.f32.mrf.mxu0
    %1275 = vmatprep.mubr.f32.mxu0 0.0
    %1276 = vmatmul.mubr.f32.gmra.mxu0 %v1194
    %v1277 = vpop.f32.mrf.mxu0
    %v1278 = vadd.f32 0.0, %v1277
    %v1279 = vpop.f32.mrf.mxu0
    %1280 = vdwg.mxu0
    %vm1281 = vcmask 261120
    %v1283 = vsel %vm1281, %v109, 0
    %v1286 = vsel %vm1281, %v110, 0
    %v1289 = vsel %vm1281, %v111, 0
    %v1292 = vsel %vm1281, %v112, 0
    %1294 = vmatprep.subr.mxu0 0.0
    %1295 = vmatpush1.msra.mxu0 0.0
    %1296 = vmatprep.subr.mxu0 0.0
    %1297 = vmatpush1.msra.mxu0 0.0
    %1298 = vmatprep.subr.mxu0 0.0
    %1299 = vmatpush1.msra.mxu0 0.0
    %1300 = vmatprep.subr.mxu0 0.0
    %1301 = vmatpush1.msra.mxu0 0.0
    %1302 = vmatprep.subr.mxu0 0.0
    %1303 = vmatpush1.msra.mxu0 0.0
    %1304 = vmatprep.subr.mxu0 0.0
    %1305 = vmatpush1.msra.mxu0 0.0
    %1306 = vmatprep.subr.mxu0 0.0
    %1307 = vmatpush1.msra.mxu0 0.0
    %1308 = vmatprep.subr.mxu0 0.0
    %1309 = vmatpush1.msra.mxu0 0.0
    %1310 = vmatprep.subr.mxu0 0.0
    %1311 = vmatpush1.msra.mxu0 0.0
    %1312 = vmatprep.subr.mxu0 0.0
    %1313 = vmatpush1.msra.mxu0 0.0
    %1314 = vmatprep.subr.mxu0 0.0
    %1315 = vmatpush1.msra.mxu0 0.0
    %1316 = vmatprep.subr.mxu0 0.0
    %1317 = vmatpush1.msra.mxu0 0.0
    %1318 = vmatprep.subr.mxu0 0.0
    %1319 = vmatpush1.msra.mxu0 %v909
    %1320 = vmatprep.subr.mxu0 0.0
    %1321 = vmatpush1.msra.mxu0 %v903
    %1322 = vmatprep.subr.mxu0 0.0
    %1323 = vmatpush1.msra.mxu0 %v897
    %1324 = vmatprep.subr.mxu0 0.0
    %1325 = vmatpush1.msra.mxu0 %v891
    %1326 = vmatprep.subr.mxu0 0.0
    %1327 = vmatpush2.msra.mxu0 0.0
    %1328 = vmatprep.subr.mxu0 0.0
    %1329 = vmatpush2.msra.mxu0 0.0
    %1330 = vmatprep.subr.mxu0 0.0
    %1331 = vmatpush2.msra.mxu0 0.0
    %1332 = vmatprep.subr.mxu0 0.0
    %1333 = vmatpush2.msra.mxu0 0.0
    %1334 = vmatprep.subr.mxu0 0.0
    %1335 = vmatpush2.msra.mxu0 0.0
    %1336 = vmatprep.subr.mxu0 0.0
    %1337 = vmatpush2.msra.mxu0 0.0
    %1338 = vmatprep.subr.mxu0 0.0
    %1339 = vmatpush2.msra.mxu0 0.0
    %1340 = vmatprep.subr.mxu0 0.0
    %1341 = vmatpush2.msra.mxu0 0.0
    %1342 = vmatprep.subr.mxu0 0.0
    %1343 = vmatpush2.msra.mxu0 0.0
    %1344 = vmatprep.subr.mxu0 0.0
    %1345 = vmatpush2.msra.mxu0 0.0
    %1346 = vmatprep.subr.mxu0 0.0
    %1347 = vmatpush2.msra.mxu0 0.0
    %1348 = vmatprep.subr.mxu0 0.0
    %1349 = vmatpush2.msra.mxu0 0.0
    %1350 = vmatprep.subr.mxu0 0.0
    %1351 = vmatpush2.msra.mxu0 0.0
    %1352 = vmatprep.subr.mxu0 0.0
    %1353 = vmatpush2.msra.mxu0 0.0
    %1354 = vmatprep.subr.mxu0 0.0
    %1355 = vmatpush2.msra.mxu0 0.0
    %1356 = vmatprep.subr.mxu0 0.0
    %1357 = vmatpush2.msra.mxu0 0.0
    %1358 = vmatprep.mubr.f32.mxu0 0.0
    %1359 = vmatmul.mubr.f32.gmra.mxu0 %v1283
    %v1360 = vpop.f32.mrf.mxu0
    %v1361 = vadd.f32 %v1263, %v1360
    %v1362 = vpop.f32.mrf.mxu0
    %1363 = vmatprep.mubr.f32.mxu0 0.0
    %1364 = vmatmul.mubr.f32.gmra.mxu0 %v1286
    %v1365 = vpop.f32.mrf.mxu0
    %v1366 = vadd.f32 %v1268, %v1365
    %v1367 = vpop.f32.mrf.mxu0
    %1368 = vmatprep.mubr.f32.mxu0 0.0
    %1369 = vmatmul.mubr.f32.gmra.mxu0 %v1289
    %v1370 = vpop.f32.mrf.mxu0
    %v1371 = vadd.f32 %v1273, %v1370
    %v1372 = vpop.f32.mrf.mxu0
    %1373 = vmatprep.mubr.f32.mxu0 0.0
    %1374 = vmatmul.mubr.f32.gmra.mxu0 %v1292
    %v1375 = vpop.f32.mrf.mxu0
    %v1376 = vadd.f32 %v1278, %v1375
    %v1377 = vpop.f32.mrf.mxu0
    %1378 = vdwg.mxu0
    %v1379 = vadd.f32 %v1361, %v889
    %v1380 = vadd.f32 %v1366, %v895
    %v1381 = vadd.f32 %v1371, %v901
    %v1382 = vadd.f32 %v1376, %v907
    %v1383 = vadd.f32 %v1379, 1e-06
    %v1384 = vadd.f32 %v1380, 1e-06
    %v1385 = vadd.f32 %v1381, 1e-06
    %v1386 = vadd.f32 %v1382, 1e-06
    %1387 = vadd.xlane.f32.xlu0 %v1383
    %v1388 = vpop.xlane.xlu0 %1387
    %1389 = vadd.xlane.f32.xlu0 %v1384
    %v1390 = vpop.xlane.xlu0 %1389
    %1391 = vadd.xlane.f32.xlu0 %v1385
    %v1392 = vpop.xlane.xlu0 %1391
    %1393 = vadd.xlane.f32.xlu0 %v1386
    %v1394 = vpop.xlane.xlu0 %1393
    %v1395 = vmul.f32 %v1388, %v404
    %v1396 = vmul.f32 %v1390, %v404
    %v1397 = vmul.f32 %v1392, %v404
    %v1398 = vmul.f32 %v1394, %v404
    %v1399 = vsub.f32 %v1383, %v1395
    %v1400 = vsub.f32 %v1384, %v1396
    %v1401 = vsub.f32 %v1385, %v1397
    %v1402 = vsub.f32 %v1386, %v1398
    %v1403 = vmul.f32 %v1399, %v1399
    %v1404 = vmul.f32 %v1400, %v1400
    %v1405 = vmul.f32 %v1401, %v1401
    %v1406 = vmul.f32 %v1402, %v1402
    %1407 = vadd.xlane.f32.xlu0 %v1403
    %v1408 = vpop.xlane.xlu0 %1407
    %1409 = vadd.xlane.f32.xlu0 %v1404
    %v1410 = vpop.xlane.xlu0 %1409
    %1411 = vadd.xlane.f32.xlu0 %v1405
    %v1412 = vpop.xlane.xlu0 %1411
    %1413 = vadd.xlane.f32.xlu0 %v1406
    %v1414 = vpop.xlane.xlu0 %1413
    %v1415 = vmul.f32 %v1408, %v404
    %v1416 = vmul.f32 %v1410, %v404
    %v1417 = vmul.f32 %v1412, %v404
    %v1418 = vmul.f32 %v1414, %v404
    %v1419 = vadd.f32 %v1415, 1e-05
    %v1420 = vadd.f32 %v1416, 1e-05
    %v1421 = vadd.f32 %v1417, 1e-05
    %v1422 = vadd.f32 %v1418, 1e-05
    %v1423 = vrsqrt.pop %v1419
    %v1424 = vrsqrt.pop %v1420
    %v1425 = vrsqrt.pop %v1421
    %v1426 = vrsqrt.pop %v1422
    %v1427 = vmul.f32 %v1399, %v1423
    %v1428 = vmul.f32 %v1400, %v1424
    %v1429 = vmul.f32 %v1401, %v1425
    %v1430 = vmul.f32 %v1402, %v1426
    %v1431 = vld [vmem:[#allocation8] sm:$0xff]
    %v1432 = vld [vmem:[#allocation8 + $0x8] sm:$0xff]
    %v1433 = vld [vmem:[#allocation8 + $0x10] sm:$0xff]
    %v1434 = vld [vmem:[#allocation8 + $0x18] sm:$0xff]
    %v1435 = vld [vmem:[#allocation8 + $0x20] sm:$0xff]
    %v1436 = vld [vmem:[#allocation8 + $0x28] sm:$0xff]
    %v1437 = vld [vmem:[#allocation8 + $0x30] sm:$0xff]
    %v1438 = vld [vmem:[#allocation8 + $0x38] sm:$0xff]
    %v1439 = vld [vmem:[#allocation8 + $0x40] sm:$0xff]
    %v1440 = vld [vmem:[#allocation8 + $0x48] sm:$0xff]
    %v1441 = vld [vmem:[#allocation8 + $0x50] sm:$0xff]
    %v1442 = vld [vmem:[#allocation8 + $0x58] sm:$0xff]
    %v1443 = vld [vmem:[#allocation8 + $0x60] sm:$0xff]
    %v1444 = vld [vmem:[#allocation8 + $0x68] sm:$0xff]
    %v1445 = vld [vmem:[#allocation8 + $0x70] sm:$0xff]
    %v1446 = vld [vmem:[#allocation8 + $0x78] sm:$0xff]
    %v1447 = vld [vmem:[#allocation8 + $0x80] sm:$0xff]
    %v1448 = vld [vmem:[#allocation8 + $0x88] sm:$0xff]
    %v1449 = vld [vmem:[#allocation8 + $0x90] sm:$0xff]
    %v1450 = vld [vmem:[#allocation8 + $0x98] sm:$0xff]
    %v1451 = vld [vmem:[#allocation8 + $0xa0] sm:$0xff]
    %v1452 = vld [vmem:[#allocation8 + $0xa8] sm:$0xff]
    %v1453 = vld [vmem:[#allocation8 + $0xb0] sm:$0xff]
    %v1454 = vld [vmem:[#allocation8 + $0xb8] sm:$0xff]
    %v1455 = vld [vmem:[#allocation8 + $0xc0] sm:$0xff]
    %v1456 = vld [vmem:[#allocation8 + $0xc8] sm:$0xff]
    %v1457 = vld [vmem:[#allocation8 + $0xd0] sm:$0xff]
    %v1458 = vld [vmem:[#allocation8 + $0xd8] sm:$0xff]
    %v1459 = vld [vmem:[#allocation8 + $0xe0] sm:$0xff]
    %v1460 = vld [vmem:[#allocation8 + $0xe8] sm:$0xff]
    %v1461 = vld [vmem:[#allocation8 + $0xf0] sm:$0xff]
    %v1462 = vld [vmem:[#allocation8 + $0xf8] sm:$0xff]
    %v1463 = vld [vmem:[#allocation8 + $0x100] sm:$0xff]
    %v1464 = vld [vmem:[#allocation8 + $0x108] sm:$0xff]
    %v1465 = vld [vmem:[#allocation8 + $0x110] sm:$0xff]
    %v1466 = vld [vmem:[#allocation8 + $0x118] sm:$0xff]
    %v1467 = vld [vmem:[#allocation8 + $0x120] sm:$0xff]
    %v1468 = vld [vmem:[#allocation8 + $0x128] sm:$0xff]
    %v1469 = vld [vmem:[#allocation8 + $0x130] sm:$0xff]
    %v1470 = vld [vmem:[#allocation8 + $0x138] sm:$0xff]
    %v1471 = vld [vmem:[#allocation8 + $0x140] sm:$0xff]
    %v1472 = vld [vmem:[#allocation8 + $0x148] sm:$0xff]
    %v1473 = vld [vmem:[#allocation8 + $0x150] sm:$0xff]
    %v1474 = vld [vmem:[#allocation8 + $0x158] sm:$0xff]
    %v1475 = vld [vmem:[#allocation8 + $0x160] sm:$0xff]
    %v1476 = vld [vmem:[#allocation8 + $0x168] sm:$0xff]
    %v1477 = vld [vmem:[#allocation8 + $0x170] sm:$0xff]
    %v1478 = vld [vmem:[#allocation8 + $0x178] sm:$0xff]
    %v1479 = vld [vmem:[#allocation8 + $0x180] sm:$0xff]
    %v1480 = vld [vmem:[#allocation8 + $0x188] sm:$0xff]
    %v1481 = vld [vmem:[#allocation8 + $0x190] sm:$0xff]
    %v1482 = vld [vmem:[#allocation8 + $0x198] sm:$0xff]
    %v1483 = vld [vmem:[#allocation8 + $0x1a0] sm:$0xff]
    %v1484 = vld [vmem:[#allocation8 + $0x1a8] sm:$0xff]
    %v1485 = vld [vmem:[#allocation8 + $0x1b0] sm:$0xff]
    %v1486 = vld [vmem:[#allocation8 + $0x1b8] sm:$0xff]
    %v1487 = vld [vmem:[#allocation8 + $0x1c0] sm:$0xff]
    %v1488 = vld [vmem:[#allocation8 + $0x1c8] sm:$0xff]
    %v1489 = vld [vmem:[#allocation8 + $0x1d0] sm:$0xff]
    %v1490 = vld [vmem:[#allocation8 + $0x1d8] sm:$0xff]
    %v1491 = vld [vmem:[#allocation8 + $0x1e0] sm:$0xff]
    %v1492 = vld [vmem:[#allocation8 + $0x1e8] sm:$0xff]
    %v1493 = vld [vmem:[#allocation8 + $0x1f0] sm:$0xff]
    %v1494 = vld [vmem:[#allocation8 + $0x1f8] sm:$0xff]
    %v1495 = vld [vmem:[#allocation8 + $0x200] sm:$0xff]
    %v1496 = vld [vmem:[#allocation8 + $0x208] sm:$0xff]
    %v1497 = vld [vmem:[#allocation8 + $0x210] sm:$0xff]
    %v1498 = vld [vmem:[#allocation8 + $0x218] sm:$0xff]
    %v1499 = vld [vmem:[#allocation8 + $0x220] sm:$0xff]
    %v1500 = vld [vmem:[#allocation8 + $0x228] sm:$0xff]
    %v1501 = vld [vmem:[#allocation8 + $0x230] sm:$0xff]
    %v1502 = vld [vmem:[#allocation8 + $0x238] sm:$0xff]
    %v1503 = vld [vmem:[#allocation8 + $0x240] sm:$0xff]
    %v1504 = vld [vmem:[#allocation8 + $0x248] sm:$0xff]
    %v1505 = vld [vmem:[#allocation8 + $0x250] sm:$0xff]
    %v1506 = vld [vmem:[#allocation8 + $0x258] sm:$0xff]
    %v1507 = vld [vmem:[#allocation8 + $0x260] sm:$0xff]
    %v1508 = vld [vmem:[#allocation8 + $0x268] sm:$0xff]
    %v1509 = vld [vmem:[#allocation8 + $0x270] sm:$0xff]
    %v1510 = vld [vmem:[#allocation8 + $0x278] sm:$0xff]
    %1511 = vmatprep.subr.mxu0 %v1507
    %1512 = vmatpush1.msra.mxu0 %v1506
    %1513 = vmatprep.subr.mxu0 %v1502
    %1514 = vmatpush1.msra.mxu0 %v1501
    %1515 = vmatprep.subr.mxu0 %v1497
    %1516 = vmatpush1.msra.mxu0 %v1496
    %1517 = vmatprep.subr.mxu0 %v1492
    %1518 = vmatpush1.msra.mxu0 %v1491
    %1519 = vmatprep.subr.mxu0 %v1487
    %1520 = vmatpush1.msra.mxu0 %v1486
    %1521 = vmatprep.subr.mxu0 %v1482
    %1522 = vmatpush1.msra.mxu0 %v1481
    %1523 = vmatprep.subr.mxu0 %v1477
    %1524 = vmatpush1.msra.mxu0 %v1476
    %1525 = vmatprep.subr.mxu0 %v1472
    %1526 = vmatpush1.msra.mxu0 %v1471
    %1527 = vmatprep.subr.mxu0 %v1467
    %1528 = vmatpush1.msra.mxu0 %v1466
    %1529 = vmatprep.subr.mxu0 %v1462
    %1530 = vmatpush1.msra.mxu0 %v1461
    %1531 = vmatprep.subr.mxu0 %v1457
    %1532 = vmatpush1.msra.mxu0 %v1456
    %1533 = vmatprep.subr.mxu0 %v1452
    %1534 = vmatpush1.msra.mxu0 %v1451
    %1535 = vmatprep.subr.mxu0 %v1447
    %1536 = vmatpush1.msra.mxu0 %v1446
    %1537 = vmatprep.subr.mxu0 %v1442
    %1538 = vmatpush1.msra.mxu0 %v1441
    %1539 = vmatprep.subr.mxu0 %v1437
    %1540 = vmatpush1.msra.mxu0 %v1436
    %1541 = vmatprep.subr.mxu0 %v1432
    %1542 = vmatpush1.msra.mxu0 %v1431
    %1543 = vmatprep.subr.mxu0 0.0
    %1544 = vmatpush2.msra.mxu0 0.0
    %1545 = vmatprep.subr.mxu0 0.0
    %1546 = vmatpush2.msra.mxu0 0.0
    %1547 = vmatprep.subr.mxu0 0.0
    %1548 = vmatpush2.msra.mxu0 0.0
    %1549 = vmatprep.subr.mxu0 0.0
    %1550 = vmatpush2.msra.mxu0 0.0
    %1551 = vmatprep.subr.mxu0 0.0
    %1552 = vmatpush2.msra.mxu0 0.0
    %1553 = vmatprep.subr.mxu0 0.0
    %1554 = vmatpush2.msra.mxu0 0.0
    %1555 = vmatprep.subr.mxu0 0.0
    %1556 = vmatpush2.msra.mxu0 0.0
    %1557 = vmatprep.subr.mxu0 0.0
    %1558 = vmatpush2.msra.mxu0 0.0
    %1559 = vmatprep.subr.mxu0 0.0
    %1560 = vmatpush2.msra.mxu0 0.0
    %1561 = vmatprep.subr.mxu0 0.0
    %1562 = vmatpush2.msra.mxu0 0.0
    %1563 = vmatprep.subr.mxu0 0.0
    %1564 = vmatpush2.msra.mxu0 0.0
    %1565 = vmatprep.subr.mxu0 0.0
    %1566 = vmatpush2.msra.mxu0 0.0
    %1567 = vmatprep.subr.mxu0 0.0
    %1568 = vmatpush2.msra.mxu0 0.0
    %1569 = vmatprep.subr.mxu0 0.0
    %1570 = vmatpush2.msra.mxu0 0.0
    %1571 = vmatprep.subr.mxu0 0.0
    %1572 = vmatpush2.msra.mxu0 0.0
    %1573 = vmatprep.subr.mxu0 0.0
    %1574 = vmatpush2.msra.mxu0 0.0
    %1575 = vmatprep.mubr.f32.mxu0 0.0
    %1576 = vmatmul.mubr.f32.gmra.mxu0 %v1182
    %v1577 = vpop.f32.mrf.mxu0
    %v1578 = vadd.f32 0.0, %v1577
    %v1579 = vpop.f32.mrf.mxu0
    %1580 = vmatprep.mubr.f32.mxu0 0.0
    %1581 = vmatmul.mubr.f32.gmra.mxu0 %v1183
    %v1582 = vpop.f32.mrf.mxu0
    %v1583 = vadd.f32 0.0, %v1582
    %v1584 = vpop.f32.mrf.mxu0
    %1585 = vmatprep.mubr.f32.mxu0 0.0
    %1586 = vmatmul.mubr.f32.gmra.mxu0 %v1427
    %v1587 = vpop.f32.mrf.mxu0
    %v1588 = vpop.f32.mrf.mxu0
    %1589 = vmatprep.mubr.f32.mxu0 0.0
    %1590 = vmatmul.mubr.f32.gmra.mxu0 %v1428
    %v1591 = vpop.f32.mrf.mxu0
    %v1592 = vpop.f32.mrf.mxu0
    %1593 = vmatprep.mubr.f32.mxu0 0.0
    %1594 = vmatmul.mubr.f32.gmra.mxu0 %v1429
    %v1595 = vpop.f32.mrf.mxu0
    %v1596 = vpop.f32.mrf.mxu0
    %1597 = vmatprep.mubr.f32.mxu0 0.0
    %1598 = vmatmul.mubr.f32.gmra.mxu0 %v1430
    %v1599 = vpop.f32.mrf.mxu0
    %v1600 = vpop.f32.mrf.mxu0
    %1601 = vdwg.mxu0
    %1602 = vmatprep.subr.mxu0 %v1509
    %1603 = vmatpush1.msra.mxu0 %v1508
    %1604 = vmatprep.subr.mxu0 %v1504
    %1605 = vmatpush1.msra.mxu0 %v1503
    %1606 = vmatprep.subr.mxu0 %v1499
    %1607 = vmatpush1.msra.mxu0 %v1498
    %1608 = vmatprep.subr.mxu0 %v1494
    %1609 = vmatpush1.msra.mxu0 %v1493
    %1610 = vmatprep.subr.mxu0 %v1489
    %1611 = vmatpush1.msra.mxu0 %v1488
    %1612 = vmatprep.subr.mxu0 %v1484
    %1613 = vmatpush1.msra.mxu0 %v1483
    %1614 = vmatprep.subr.mxu0 %v1479
    %1615 = vmatpush1.msra.mxu0 %v1478
    %1616 = vmatprep.subr.mxu0 %v1474
    %1617 = vmatpush1.msra.mxu0 %v1473
    %1618 = vmatprep.subr.mxu0 %v1469
    %1619 = vmatpush1.msra.mxu0 %v1468
    %1620 = vmatprep.subr.mxu0 %v1464
    %1621 = vmatpush1.msra.mxu0 %v1463
    %1622 = vmatprep.subr.mxu0 %v1459
    %1623 = vmatpush1.msra.mxu0 %v1458
    %1624 = vmatprep.subr.mxu0 %v1454
    %1625 = vmatpush1.msra.mxu0 %v1453
    %1626 = vmatprep.subr.mxu0 %v1449
    %1627 = vmatpush1.msra.mxu0 %v1448
    %1628 = vmatprep.subr.mxu0 %v1444
    %1629 = vmatpush1.msra.mxu0 %v1443
    %1630 = vmatprep.subr.mxu0 %v1439
    %1631 = vmatpush1.msra.mxu0 %v1438
    %1632 = vmatprep.subr.mxu0 %v1434
    %1633 = vmatpush1.msra.mxu0 %v1433
    %1634 = vmatprep.subr.mxu0 0.0
    %1635 = vmatpush2.msra.mxu0 0.0
    %1636 = vmatprep.subr.mxu0 0.0
    %1637 = vmatpush2.msra.mxu0 0.0
    %1638 = vmatprep.subr.mxu0 0.0
    %1639 = vmatpush2.msra.mxu0 0.0
    %1640 = vmatprep.subr.mxu0 0.0
    %1641 = vmatpush2.msra.mxu0 0.0
    %1642 = vmatprep.subr.mxu0 0.0
    %1643 = vmatpush2.msra.mxu0 0.0
    %1644 = vmatprep.subr.mxu0 0.0
    %1645 = vmatpush2.msra.mxu0 0.0
    %1646 = vmatprep.subr.mxu0 0.0
    %1647 = vmatpush2.msra.mxu0 0.0
    %1648 = vmatprep.subr.mxu0 0.0
    %1649 = vmatpush2.msra.mxu0 0.0
    %1650 = vmatprep.subr.mxu0 0.0
    %1651 = vmatpush2.msra.mxu0 0.0
    %1652 = vmatprep.subr.mxu0 0.0
    %1653 = vmatpush2.msra.mxu0 0.0
    %1654 = vmatprep.subr.mxu0 0.0
    %1655 = vmatpush2.msra.mxu0 0.0
    %1656 = vmatprep.subr.mxu0 0.0
    %1657 = vmatpush2.msra.mxu0 0.0
    %1658 = vmatprep.subr.mxu0 0.0
    %1659 = vmatpush2.msra.mxu0 0.0
    %1660 = vmatprep.subr.mxu0 0.0
    %1661 = vmatpush2.msra.mxu0 0.0
    %1662 = vmatprep.subr.mxu0 0.0
    %1663 = vmatpush2.msra.mxu0 0.0
    %1664 = vmatprep.subr.mxu0 0.0
    %1665 = vmatpush2.msra.mxu0 0.0
    %1666 = vmatprep.mubr.f32.mxu0 0.0
    %1667 = vmatmul.mubr.f32.gmra.mxu0 %v1182
    %v1668 = vpop.f32.mrf.mxu0
    %v1669 = vadd.f32 0.0, %v1668
    %v1670 = vpop.f32.mrf.mxu0
    %1671 = vmatprep.mubr.f32.mxu0 0.0
    %1672 = vmatmul.mubr.f32.gmra.mxu0 %v1183
    %v1673 = vpop.f32.mrf.mxu0
    %v1674 = vadd.f32 0.0, %v1673
    %v1675 = vpop.f32.mrf.mxu0
    %1676 = vmatprep.mubr.f32.mxu0 0.0
    %1677 = vmatmul.mubr.f32.gmra.mxu0 %v1427
    %v1678 = vpop.f32.mrf.mxu0
    %v1679 = vpop.f32.mrf.mxu0
    %1680 = vmatprep.mubr.f32.mxu0 0.0
    %1681 = vmatmul.mubr.f32.gmra.mxu0 %v1428
    %v1682 = vpop.f32.mrf.mxu0
    %v1683 = vpop.f32.mrf.mxu0
    %1684 = vmatprep.mubr.f32.mxu0 0.0
    %1685 = vmatmul.mubr.f32.gmra.mxu0 %v1429
    %v1686 = vpop.f32.mrf.mxu0
    %v1687 = vpop.f32.mrf.mxu0
    %1688 = vmatprep.mubr.f32.mxu0 0.0
    %1689 = vmatmul.mubr.f32.gmra.mxu0 %v1430
    %v1690 = vpop.f32.mrf.mxu0
    %v1691 = vpop.f32.mrf.mxu0
    %1692 = vdwg.mxu0
    %1693 = vmatprep.subr.mxu0 0.0
    %1694 = vmatpush1.msra.mxu0 %v1510
    %1695 = vmatprep.subr.mxu0 0.0
    %1696 = vmatpush1.msra.mxu0 %v1505
    %1697 = vmatprep.subr.mxu0 0.0
    %1698 = vmatpush1.msra.mxu0 %v1500
    %1699 = vmatprep.subr.mxu0 0.0
    %1700 = vmatpush1.msra.mxu0 %v1495
    %1701 = vmatprep.subr.mxu0 0.0
    %1702 = vmatpush1.msra.mxu0 %v1490
    %1703 = vmatprep.subr.mxu0 0.0
    %1704 = vmatpush1.msra.mxu0 %v1485
    %1705 = vmatprep.subr.mxu0 0.0
    %1706 = vmatpush1.msra.mxu0 %v1480
    %1707 = vmatprep.subr.mxu0 0.0
    %1708 = vmatpush1.msra.mxu0 %v1475
    %1709 = vmatprep.subr.mxu0 0.0
    %1710 = vmatpush1.msra.mxu0 %v1470
    %1711 = vmatprep.subr.mxu0 0.0
    %1712 = vmatpush1.msra.mxu0 %v1465
    %1713 = vmatprep.subr.mxu0 0.0
    %1714 = vmatpush1.msra.mxu0 %v1460
    %1715 = vmatprep.subr.mxu0 0.0
    %1716 = vmatpush1.msra.mxu0 %v1455
    %1717 = vmatprep.subr.mxu0 0.0
    %1718 = vmatpush1.msra.mxu0 %v1450
    %1719 = vmatprep.subr.mxu0 0.0
    %1720 = vmatpush1.msra.mxu0 %v1445
    %1721 = vmatprep.subr.mxu0 0.0
    %1722 = vmatpush1.msra.mxu0 %v1440
    %1723 = vmatprep.subr.mxu0 0.0
    %1724 = vmatpush1.msra.mxu0 %v1435
    %1725 = vmatprep.subr.mxu0 0.0
    %1726 = vmatpush2.msra.mxu0 0.0
    %1727 = vmatprep.subr.mxu0 0.0
    %1728 = vmatpush2.msra.mxu0 0.0
    %1729 = vmatprep.subr.mxu0 0.0
    %1730 = vmatpush2.msra.mxu0 0.0
    %1731 = vmatprep.subr.mxu0 0.0
    %1732 = vmatpush2.msra.mxu0 0.0
    %1733 = vmatprep.subr.mxu0 0.0
    %1734 = vmatpush2.msra.mxu0 0.0
    %1735 = vmatprep.subr.mxu0 0.0
    %1736 = vmatpush2.msra.mxu0 0.0
    %1737 = vmatprep.subr.mxu0 0.0
    %1738 = vmatpush2.msra.mxu0 0.0
    %1739 = vmatprep.subr.mxu0 0.0
    %1740 = vmatpush2.msra.mxu0 0.0
    %1741 = vmatprep.subr.mxu0 0.0
    %1742 = vmatpush2.msra.mxu0 0.0
    %1743 = vmatprep.subr.mxu0 0.0
    %1744 = vmatpush2.msra.mxu0 0.0
    %1745 = vmatprep.subr.mxu0 0.0
    %1746 = vmatpush2.msra.mxu0 0.0
    %1747 = vmatprep.subr.mxu0 0.0
    %1748 = vmatpush2.msra.mxu0 0.0
    %1749 = vmatprep.subr.mxu0 0.0
    %1750 = vmatpush2.msra.mxu0 0.0
    %1751 = vmatprep.subr.mxu0 0.0
    %1752 = vmatpush2.msra.mxu0 0.0
    %1753 = vmatprep.subr.mxu0 0.0
    %1754 = vmatpush2.msra.mxu0 0.0
    %1755 = vmatprep.subr.mxu0 0.0
    %1756 = vmatpush2.msra.mxu0 0.0
    %1757 = vmatprep.mubr.f32.mxu0 0.0
    %1758 = vmatmul.mubr.f32.gmra.mxu0 %v1182
    %v1759 = vpop.f32.mrf.mxu0
    %v1760 = vpop.f32.mrf.mxu0
    %1761 = vmatprep.mubr.f32.mxu0 0.0
    %1762 = vmatmul.mubr.f32.gmra.mxu0 %v1183
    %v1763 = vpop.f32.mrf.mxu0
    %v1764 = vpop.f32.mrf.mxu0
    %1765 = vmatprep.mubr.f32.mxu0 0.0
    %1766 = vmatmul.mubr.f32.gmra.mxu0 %v1427
    %v1767 = vpop.f32.mrf.mxu0
    %v1768 = vadd.f32 0.0, %v1767
    %v1769 = vpop.f32.mrf.mxu0
    %1770 = vmatprep.mubr.f32.mxu0 0.0
    %1771 = vmatmul.mubr.f32.gmra.mxu0 %v1428
    %v1772 = vpop.f32.mrf.mxu0
    %v1773 = vpop.f32.mrf.mxu0
    %1774 = vmatprep.mubr.f32.mxu0 0.0
    %1775 = vmatmul.mubr.f32.gmra.mxu0 %v1429
    %v1776 = vpop.f32.mrf.mxu0
    %v1777 = vpop.f32.mrf.mxu0
    %1778 = vmatprep.mubr.f32.mxu0 0.0
    %1779 = vmatmul.mubr.f32.gmra.mxu0 %v1430
    %v1780 = vpop.f32.mrf.mxu0
    %v1781 = vpop.f32.mrf.mxu0
    %1782 = vdwg.mxu0
    %1783 = vmatprep.subr.mxu0 0.0
    %1784 = vmatpush1.msra.mxu0 0.0
    %1785 = vmatprep.subr.mxu0 0.0
    %1786 = vmatpush1.msra.mxu0 0.0
    %1787 = vmatprep.subr.mxu0 0.0
    %1788 = vmatpush1.msra.mxu0 0.0
    %1789 = vmatprep.subr.mxu0 0.0
    %1790 = vmatpush1.msra.mxu0 0.0
    %1791 = vmatprep.subr.mxu0 0.0
    %1792 = vmatpush1.msra.mxu0 0.0
    %1793 = vmatprep.subr.mxu0 0.0
    %1794 = vmatpush1.msra.mxu0 0.0
    %1795 = vmatprep.subr.mxu0 0.0
    %1796 = vmatpush1.msra.mxu0 0.0
    %1797 = vmatprep.subr.mxu0 0.0
    %1798 = vmatpush1.msra.mxu0 0.0
    %1799 = vmatprep.subr.mxu0 0.0
    %1800 = vmatpush1.msra.mxu0 0.0
    %1801 = vmatprep.subr.mxu0 0.0
    %1802 = vmatpush1.msra.mxu0 0.0
    %1803 = vmatprep.subr.mxu0 0.0
    %1804 = vmatpush1.msra.mxu0 0.0
    %1805 = vmatprep.subr.mxu0 0.0
    %1806 = vmatpush1.msra.mxu0 0.0
    %1807 = vmatprep.subr.mxu0 0.0
    %1808 = vmatpush1.msra.mxu0 0.0
    %1809 = vmatprep.subr.mxu0 0.0
    %1810 = vmatpush1.msra.mxu0 0.0
    %1811 = vmatprep.subr.mxu0 0.0
    %1812 = vmatpush1.msra.mxu0 0.0
    %1813 = vmatprep.subr.mxu0 0.0
    %1814 = vmatpush1.msra.mxu0 %v1768
    %1815 = vmatprep.subr.mxu0 0.0
    %1816 = vmatpush2.msra.mxu0 0.0
    %1817 = vmatprep.subr.mxu0 0.0
    %1818 = vmatpush2.msra.mxu0 0.0
    %1819 = vmatprep.subr.mxu0 0.0
    %1820 = vmatpush2.msra.mxu0 0.0
    %1821 = vmatprep.subr.mxu0 0.0
    %1822 = vmatpush2.msra.mxu0 0.0
    %1823 = vmatprep.subr.mxu0 0.0
    %1824 = vmatpush2.msra.mxu0 0.0
    %1825 = vmatprep.subr.mxu0 0.0
    %1826 = vmatpush2.msra.mxu0 0.0
    %1827 = vmatprep.subr.mxu0 0.0
    %1828 = vmatpush2.msra.mxu0 0.0
    %1829 = vmatprep.subr.mxu0 0.0
    %1830 = vmatpush2.msra.mxu0 0.0
    %1831 = vmatprep.subr.mxu0 0.0
    %1832 = vmatpush2.msra.mxu0 0.0
    %1833 = vmatprep.subr.mxu0 0.0
    %1834 = vmatpush2.msra.mxu0 0.0
    %1835 = vmatprep.subr.mxu0 0.0
    %1836 = vmatpush2.msra.mxu0 0.0
    %1837 = vmatprep.subr.mxu0 0.0
    %1838 = vmatpush2.msra.mxu0 0.0
    %1839 = vmatprep.subr.mxu0 0.0
    %1840 = vmatpush2.msra.mxu0 0.0
    %1841 = vmatprep.subr.mxu0 0.0
    %1842 = vmatpush2.msra.mxu0 0.0
    %1843 = vmatprep.subr.mxu0 0.0
    %1844 = vmatpush2.msra.mxu0 0.0
    %1845 = vmatprep.subr.mxu0 0.0
    %1846 = vmatpush2.msra.mxu0 0.0
    %1847 = vmatprep.mubr.f32.mxu0 0.0
    %1848 = vmatmul.mubr.f32.gmra.mxu0 %v1003
    %v1849 = vpop.f32.mrf.mxu0
    %v1850 = vadd.f32 0.0, %v1849
    %v1851 = vpop.f32.mrf.mxu0
    %1852 = vmatprep.mubr.f32.mxu0 0.0
    %1853 = vmatmul.mubr.f32.gmra.mxu0 %v1006
    %v1854 = vpop.f32.mrf.mxu0
    %v1855 = vadd.f32 0.0, %v1854
    %v1856 = vpop.f32.mrf.mxu0
    %1857 = vdwg.mxu0
    %1858 = vmatprep.subr.mxu0 0.0
    %1859 = vmatpush1.msra.mxu0 0.0
    %1860 = vmatprep.subr.mxu0 0.0
    %1861 = vmatpush1.msra.mxu0 0.0
    %1862 = vmatprep.subr.mxu0 0.0
    %1863 = vmatpush1.msra.mxu0 0.0
    %1864 = vmatprep.subr.mxu0 0.0
    %1865 = vmatpush1.msra.mxu0 0.0
    %1866 = vmatprep.subr.mxu0 0.0
    %1867 = vmatpush1.msra.mxu0 0.0
    %1868 = vmatprep.subr.mxu0 0.0
    %1869 = vmatpush1.msra.mxu0 0.0
    %1870 = vmatprep.subr.mxu0 0.0
    %1871 = vmatpush1.msra.mxu0 0.0
    %1872 = vmatprep.subr.mxu0 0.0
    %1873 = vmatpush1.msra.mxu0 0.0
    %1874 = vmatprep.subr.mxu0 0.0
    %1875 = vmatpush1.msra.mxu0 0.0
    %1876 = vmatprep.subr.mxu0 0.0
    %1877 = vmatpush1.msra.mxu0 0.0
    %1878 = vmatprep.subr.mxu0 0.0
    %1879 = vmatpush1.msra.mxu0 0.0
    %1880 = vmatprep.subr.mxu0 0.0
    %1881 = vmatpush1.msra.mxu0 0.0
    %1882 = vmatprep.subr.mxu0 0.0
    %1883 = vmatpush1.msra.mxu0 0.0
    %1884 = vmatprep.subr.mxu0 0.0
    %1885 = vmatpush1.msra.mxu0 0.0
    %1886 = vmatprep.subr.mxu0 0.0
    %1887 = vmatpush1.msra.mxu0 %v1583
    %1888 = vmatprep.subr.mxu0 0.0
    %1889 = vmatpush1.msra.mxu0 %v1578
    %1890 = vmatprep.subr.mxu0 0.0
    %1891 = vmatpush2.msra.mxu0 0.0
    %1892 = vmatprep.subr.mxu0 0.0
    %1893 = vmatpush2.msra.mxu0 0.0
    %1894 = vmatprep.subr.mxu0 0.0
    %1895 = vmatpush2.msra.mxu0 0.0
    %1896 = vmatprep.subr.mxu0 0.0
    %1897 = vmatpush2.msra.mxu0 0.0
    %1898 = vmatprep.subr.mxu0 0.0
    %1899 = vmatpush2.msra.mxu0 0.0
    %1900 = vmatprep.subr.mxu0 0.0
    %1901 = vmatpush2.msra.mxu0 0.0
    %1902 = vmatprep.subr.mxu0 0.0
    %1903 = vmatpush2.msra.mxu0 0.0
    %1904 = vmatprep.subr.mxu0 0.0
    %1905 = vmatpush2.msra.mxu0 0.0
    %1906 = vmatprep.subr.mxu0 0.0
    %1907 = vmatpush2.msra.mxu0 0.0
    %1908 = vmatprep.subr.mxu0 0.0
    %1909 = vmatpush2.msra.mxu0 0.0
    %1910 = vmatprep.subr.mxu0 0.0
    %1911 = vmatpush2.msra.mxu0 0.0
    %1912 = vmatprep.subr.mxu0 0.0
    %1913 = vmatpush2.msra.mxu0 0.0
    %1914 = vmatprep.subr.mxu0 0.0
    %1915 = vmatpush2.msra.mxu0 0.0
    %1916 = vmatprep.subr.mxu0 0.0
    %1917 = vmatpush2.msra.mxu0 0.0
    %1918 = vmatprep.subr.mxu0 0.0
    %1919 = vmatpush2.msra.mxu0 0.0
    %1920 = vmatprep.subr.mxu0 0.0
    %1921 = vmatpush2.msra.mxu0 0.0
    %1922 = vmatprep.mubr.f32.mxu0 0.0
    %1923 = vmatmul.mubr.f32.gmra.mxu0 %v318
    %v1924 = vpop.f32.mrf.mxu0
    %v1925 = vadd.f32 %v1850, %v1924
    %v1926 = vpop.f32.mrf.mxu0
    %1927 = vmatprep.mubr.f32.mxu0 0.0
    %1928 = vmatmul.mubr.f32.gmra.mxu0 %v321
    %v1929 = vpop.f32.mrf.mxu0
    %v1930 = vadd.f32 %v1855, %v1929
    %v1931 = vpop.f32.mrf.mxu0
    %1932 = vdwg.mxu0
    %v1933 = vadd.f32 %v1925, %v1669
    %v1934 = vadd.f32 %v1930, %v1674
    %v1935 = vadd.f32 %v1933, 1e-06
    %v1936 = vadd.f32 %v1934, 1e-06
    %1937 = vadd.xlane.f32.xlu0 %v1935
    %v1938 = vpop.xlane.xlu0 %1937
    %1939 = vadd.xlane.f32.xlu0 %v1936
    %v1940 = vpop.xlane.xlu0 %1939
    %v1941 = vmul.f32 %v1938, %v404
    %v1942 = vmul.f32 %v1940, %v404
    %v1943 = vsub.f32 %v1935, %v1941
    %v1944 = vsub.f32 %v1936, %v1942
    %v1945 = vmul.f32 %v1943, %v1943
    %v1946 = vmul.f32 %v1944, %v1944
    %1947 = vadd.xlane.f32.xlu0 %v1945
    %v1948 = vpop.xlane.xlu0 %1947
    %1949 = vadd.xlane.f32.xlu0 %v1946
    %v1950 = vpop.xlane.xlu0 %1949
    %v1951 = vmul.f32 %v1948, %v404
    %v1952 = vmul.f32 %v1950, %v404
    %v1953 = vadd.f32 %v1951, 1e-05
    %v1954 = vadd.f32 %v1952, 1e-05
    %v1955 = vrsqrt.pop %v1953
    %v1956 = vrsqrt.pop %v1954
    %v1957 = vmul.f32 %v1943, %v1955
    %v1958 = vmul.f32 %v1944, %v1956
    %1959 = vst [vmem:[#allocation13] sm:$0xff] %v1957
    %1960 = vst [vmem:[#allocation13 + $0x8] sm:$0xff] %v1958
    // Predicated region
    $region66: #{encoder_forward.1} parent=1 // pred_check
      _
    $region67: #{encoder_forward.1} parent=1 // pred_check_branch
      %1962 = sbr.rel (0) target = $region69
    $region68: #{encoder_forward.1} parent=1 // pred_region
      %s1964 = ssub.s32 256, 256
      %1965 = vsyncadd [#allocation4], %s1964
      %s1966 = sshll.u32 [#allocation10], 4
      %s1967 = int_to_ptr.vmem [resolvable:$true] %s1966
      %1972 = dma.vmem_to_hbm [thread:$0]  %s1967, 256, %s12, [#allocation4], 128, 128, 8
    $region69: #{encoder_forward.1} parent=1 // pred_fallthru
      _
    // Predicated region
    $region70: #{encoder_forward.1} parent=1 // pred_check
      _
    $region71: #{encoder_forward.1} parent=1 // pred_check_branch
      %1974 = sbr.rel (0) target = $region73
    $region72: #{encoder_forward.1} parent=1 // pred_region
      %s1976 = ssub.s32 256, 256
      %1977 = vsyncadd [#allocation12], %s1976
      %s1978 = sshll.u32 [#allocation11], 4
      %s1979 = int_to_ptr.vmem [resolvable:$true] %s1978
      %1984 = dma.vmem_to_hbm [thread:$0]  %s1979, 256, %s13, [#allocation12], 128, 128, 8
    $region73: #{encoder_forward.1} parent=1 // pred_fallthru
      _
    // Predicated region
    $region74: #{encoder_forward.1} parent=1 // pred_check
      _
    $region75: #{encoder_forward.1} parent=1 // pred_check_branch
      %1986 = sbr.rel (0) target = $region77
    $region76: #{encoder_forward.1} parent=1 // pred_region
      %s1988 = ssub.s32 256, 256
      %1989 = vsyncadd [#allocation12], %s1988
      %s1990 = sshll.u32 [#allocation13], 4
      %s1991 = int_to_ptr.vmem [resolvable:$true] %s1990
      %1996 = dma.vmem_to_hbm [thread:$0]  %s1991, 256, %s14, [#allocation12], 128, 128, 8
    $region77: #{encoder_forward.1} parent=1 // pred_fallthru
      _
    // Predicated region
    $region78: #{encoder_forward.1} parent=1 // pred_check
      _
    $region79: #{encoder_forward.1} parent=1 // pred_check_branch
      %1998 = sbr.rel (0) target = $region81
    $region80: #{encoder_forward.1} parent=1 // pred_region
      %1999 = dma.done [#allocation4], 256
    $region81: #{encoder_forward.1} parent=1 // pred_fallthru
      _
    // Predicated region
    $region82: #{encoder_forward.1} parent=1 // pred_check
      _
    $region83: #{encoder_forward.1} parent=1 // pred_check_branch
      %2001 = sbr.rel (0) target = $region85
    $region84: #{encoder_forward.1} parent=1 // pred_region
      %2002 = dma.done [#allocation12], 256
    $region85: #{encoder_forward.1} parent=1 // pred_fallthru
      _
    // Predicated region
    $region86: #{encoder_forward.1} parent=1 // pred_check
      _
    $region87: #{encoder_forward.1} parent=1 // pred_check_branch
      %2004 = sbr.rel (0) target = $region89
    $region88: #{encoder_forward.1} parent=1 // pred_region
      %2005 = dma.done [#allocation12], 256
    $region89: #{encoder_forward.1} parent=1 // pred_fallthru
      _
    %2006 = vsyncpa [#allocation3], 1
    %2007 = vsyncpa [#allocation6], 1
    %2008 = vsyncpa [#allocation9], 1
    %2009 = vsyncpa [#allocation4], 1
    %2010 = vsyncpa [#allocation12], 1

</llo_original>
